<compile_context>
chip_gen: v7x
topology: tpu7x:2x2x1
jax: 0.10.0
libtpu: 0.0.40
codegen_flags: <defaults>
</compile_context>

<pallas_src>
import jax
import jax.numpy as jnp
import numpy as np
from jax.experimental import pallas as pl
from jax.experimental.pallas import tpu as pltpu

_TINY = 1e-37  # guard against a fully-underflowed column (keeps log/recip finite)


def hmm_forward_kernel(x_ref, e_ref, e0_ref, expA_ref, tlen_ref, out_ref):
    T_max, b_blk = x_ref.shape
    N_pad, M_pad = e_ref.shape

    E = e_ref[...]            # (N_pad, M_pad)
    E0 = e0_ref[...]          # (N_pad, M_pad)  emission * prior for t = 0
    A = expA_ref[...]         # (N_pad, N_pad)
    tlen = tlen_ref[...]      # (1, b_blk) int32

    # one-hot scaffold, hoisted out of the loop (JAX does not CSE broadcast_in_dim)
    lane_iota = jax.lax.broadcasted_iota(jnp.int32, (M_pad, b_blk), 0)

    def gather_emis(t, mat):
        # mat[:, x_t] as an MXU matmul against a one-hot built on the VPU (exact gather).
        xt = x_ref[pl.ds(t, 1), :]                                   # (1, b_blk) i32
        onehot = (lane_iota == xt).astype(jnp.float32)               # (M_pad, b_blk)
        return jnp.dot(mat, onehot, preferred_element_type=jnp.float32)  # (N_pad, b_blk)

    def rescale(p):
        m = jnp.maximum(jnp.max(p, axis=0, keepdims=True), _TINY)    # (1, b_blk)
        return p * pl.reciprocal(m), jnp.log(m)

    # ---- t = 0 : alpha_0 = prior * E[:, x_0]  (already folded into E0) ----
    p, logscale = rescale(gather_emis(0, E0))                        # p in [0, 1], max = 1
    p_sel = p                                                        # lanes with tlen == 1
    ls_sel = logscale

    # ---- t = 1 .. T_max-1 ----
    def body(t, carry):
        p, logscale, p_sel, ls_sel = carry
        s = jnp.dot(A, p, preferred_element_type=jnp.float32)        # MXU transition step
        p = gather_emis(t, E) * s                                     # emission (VPU)
        p, dlog = rescale(p)                                          # 1 XLU max + 1 tiny log
        logscale = logscale + dlog
        sel = tlen == t + 1                                           # pick final-timestep alpha
        p_sel = jnp.where(sel, p, p_sel)
        ls_sel = jnp.where(sel, logscale, ls_sel)
        return p, logscale, p_sel, ls_sel

    unroll = max(1, min(8, T_max - 1))
    _, _, p_sel, ls_sel = jax.lax.fori_loop(
        1, T_max, body, (p, logscale, p_sel, ls_sel), unroll=unroll)

    # log p(x) = logscale + log(sum_states p)  -- p_sel max is 1, so the sum is >= 1.
    total = jnp.sum(p_sel, axis=0, keepdims=True)
    out_ref[...] = ls_sel + jnp.log(total)


def _round_up(v, m):
    return ((v + m - 1) // m) * m


def hmm_syllable_forward(x, T, prior_u, emis_u, trans_u, b_blk=None):
    """Matches HMM_syllable.forward: returns (B, 1) log p(x).

    Assumes 0 <= x < M and 1 <= T <= T_max (same implicit contract as the torch module).
    """
    x = jnp.asarray(x, jnp.int32)
    T = jnp.asarray(T, jnp.int32)
    B, T_max = x.shape
    N, M = emis_u.shape

    N_pad = max(8, _round_up(N, 8))        # states  -> sublanes
    M_pad = _round_up(M, 128)              # vocab   -> lanes of the one-hot matmul (K dim)

    # ---- batch block selection: pick the block first, pad the batch up to it ----
    if b_blk is None:
        b_blk = min(512, _round_up(B, 128))
    # VMEM budget for the double-buffered time-major x slab (i32): keep it <= ~8 MiB.
    cap = max(128, ((8 << 20) // (2 * 4 * max(T_max, 1))) // 128 * 128)
    b_blk = max(128, min(b_blk, cap))
    B_pad = pl.cdiv(B, b_blk) * b_blk
    n_blocks = B_pad // b_blk
    if n_blocks == 1 and B_pad >= 256 and b_blk % 256 == 0:
        b_blk //= 2                         # give both TensorCores work on v7x
        n_blocks = B_pad // b_blk

    # ---- parameter normalization (once, exact, in XLA) ----
    prior = jax.nn.softmax(prior_u.astype(jnp.float32))              # (N,)
    E = jax.nn.softmax(emis_u.astype(jnp.float32), axis=1)           # (N, M)
    expA = jax.nn.softmax(trans_u.astype(jnp.float32), axis=0)       # (N, N) column-stochastic

    E_pad = jnp.zeros((N_pad, M_pad), jnp.float32).at[:N, :M].set(E)
    E0_pad = jnp.zeros((N_pad, M_pad), jnp.float32).at[:N, :M].set(E * prior[:, None])
    A_pad = jnp.zeros((N_pad, N_pad), jnp.float32).at[:N, :N].set(expA)

    x_tm = jnp.pad(x.T, ((0, 0), (0, B_pad - B)))                    # (T_max, B_pad), pad token 0
    tlen = jnp.pad(T.reshape(1, B), ((0, 0), (0, B_pad - B)))        # (1, B_pad), pad length 0

    out_padded = pl.pallas_call(
        hmm_forward_kernel,
        out_shape=jax.ShapeDtypeStruct((1, B_pad), jnp.float32),
        grid_spec=pltpu.PrefetchScalarGridSpec(
            num_scalar_prefetch=0,
            grid=(n_blocks,),
            in_specs=[
                pl.BlockSpec((T_max, b_blk), lambda b: (0, b)),      # observations, blocked on batch
                pl.BlockSpec((N_pad, M_pad), lambda b: (0, 0)),      # emission probs (replicated)
                pl.BlockSpec((N_pad, M_pad), lambda b: (0, 0)),      # emission * prior (t = 0)
                pl.BlockSpec((N_pad, N_pad), lambda b: (0, 0)),      # transition probs (replicated)
                pl.BlockSpec((1, b_blk), lambda b: (0, b)),          # lengths
            ],
            out_specs=pl.BlockSpec((1, b_blk), lambda b: (0, b)),    # lane-dense output
        ),
        compiler_params=pltpu.CompilerParams(
            dimension_semantics=("parallel",),    # batch axis pipelined / dual-TC shardable
            vmem_limit_bytes=64 << 20,
        ),
    )(x_tm, E_pad, E0_pad, A_pad, tlen)

    return out_padded[0, :B].reshape(B, 1)


def hmm_forward_ref(x, T, prior_u, emis_u, trans_u):
    """Pure-JAX reference reproducing HMM_syllable.forward (log-domain)."""
    log_prior = jax.nn.log_softmax(prior_u)            # (N,)
    log_E = jax.nn.log_softmax(emis_u, axis=1)         # (N, M)
    log_A = jax.nn.log_softmax(trans_u, axis=0)        # (N, N)
    B, T_max = x.shape
    alpha = log_E[:, x[:, 0]].T + log_prior[None, :]   # (B, N)
    log_sums = [jax.scipy.special.logsumexp(alpha, axis=1)]
    for t in range(1, T_max):
        trans = jax.scipy.special.logsumexp(log_A[None, :, :] + alpha[:, None, :], axis=-1)
        alpha = log_E[:, x[:, t]].T + trans
        log_sums.append(jax.scipy.special.logsumexp(alpha, axis=1))
    log_sums = jnp.stack(log_sums, axis=1)             # (B, T_max)
    return jnp.take_along_axis(log_sums, (T - 1)[:, None], axis=1)   # (B, 1)


if __name__ == "__main__":
    M, N = 26, 6          # vocab size, number of hidden states (module defaults)
    B, T_max = 4, 8       # small batch / sequence length

    key = jax.random.PRNGKey(0)
    k_prior, k_emis, k_trans, k_x, k_T = jax.random.split(key, 5)

    prior_u = jax.random.normal(k_prior, (N,), dtype=jnp.float32)
    emis_u = jax.random.normal(k_emis, (N, M), dtype=jnp.float32)
    trans_u = jax.random.normal(k_trans, (N, N), dtype=jnp.float32)

    x = jax.random.randint(k_x, (B, T_max), 0, M, dtype=jnp.int32)
    T = jax.random.randint(k_T, (B,), 1, T_max + 1, dtype=jnp.int32)

    out = hmm_syllable_forward(x, T, prior_u, emis_u, trans_u)
    out = jax.block_until_ready(out)

    ref = hmm_forward_ref(x, T, prior_u, emis_u, trans_u)
    # scaled linear-domain forward is exact up to f32 reassociation; 1e-4 still catches
    # any real corruption.
    np.testing.assert_allclose(np.asarray(out), np.asarray(ref), rtol=1e-4, atol=1e-4)

    # TODO(synk): sample() and viterbi() (host-side sequential sampling / backtracking) are not
    # kernelized; only forward() is implemented, as requested.
    print("KERNEL_OK")
</pallas_src>

<mosaic_0001>
module attributes {stable_mosaic.version = 11 : i64} {
  func.func @hmm_forward_kernel(%arg0: i32, %arg1: memref<8x128xi32, #tpu.memory_space<vmem>>, %arg2: memref<8x128xf32, #tpu.memory_space<vmem>>, %arg3: memref<8x128xf32, #tpu.memory_space<vmem>>, %arg4: memref<8x8xf32, #tpu.memory_space<vmem>>, %arg5: memref<1x128xi32, #tpu.memory_space<vmem>>, %arg6: memref<1x128xf32, #tpu.memory_space<vmem>>) attributes {dimension_semantics = [#tpu.dimension_semantics<parallel>], iteration_bounds = array<i64: 1>, scalar_prefetch = 0 : i64, scratch_operands = 0 : i64, tpu.core_type = #tpu.core_type<tc>, window_params = [{transform_indices = @transform_0, window_bounds = array<i64: 8, 128>}, {pipeline_mode = #tpu.pipeline_mode<synchronous>, transform_indices = @transform_1, window_bounds = array<i64: 8, 128>}, {pipeline_mode = #tpu.pipeline_mode<synchronous>, transform_indices = @transform_2, window_bounds = array<i64: 8, 128>}, {pipeline_mode = #tpu.pipeline_mode<synchronous>, transform_indices = @transform_3, window_bounds = array<i64: 8, 8>}, {transform_indices = @transform_4, window_bounds = array<i64: 1, 128>}, {transform_indices = @transform_5, window_bounds = array<i64: 1, 128>}]} {
    %c0 = arith.constant 0 : index
    %c0_0 = arith.constant 0 : index
    %0 = vector.load %arg2[%c0, %c0_0] : memref<8x128xf32, #tpu.memory_space<vmem>>, vector<8x128xf32>
    %c0_1 = arith.constant 0 : index
    %c0_2 = arith.constant 0 : index
    %1 = vector.load %arg3[%c0_1, %c0_2] : memref<8x128xf32, #tpu.memory_space<vmem>>, vector<8x128xf32>
    %c0_3 = arith.constant 0 : index
    %c0_4 = arith.constant 0 : index
    %2 = vector.load %arg4[%c0_3, %c0_4] : memref<8x8xf32, #tpu.memory_space<vmem>>, vector<8x8xf32>
    %c0_5 = arith.constant 0 : index
    %c0_6 = arith.constant 0 : index
    %3 = vector.load %arg5[%c0_5, %c0_6] : memref<1x128xi32, #tpu.memory_space<vmem>>, vector<1x128xi32>
    %4 = tpu.iota {dimensions = array<i32: 0>} : vector<128x128xi32>
    %c0_7 = arith.constant 0 : index
    %c0_8 = arith.constant 0 : index
    %5 = vector.load %arg1[%c0_7, %c0_8] : memref<8x128xi32, #tpu.memory_space<vmem>>, vector<1x128xi32>
    %6 = vector.broadcast %5 : vector<1x128xi32> to vector<128x128xi32>
    %7 = arith.cmpi eq, %4, %6 : vector<128x128xi32>
    %8 = arith.extui %7 : vector<128x128xi1> to vector<128x128xi32>
    %9 = arith.sitofp %8 : vector<128x128xi32> to vector<128x128xf32>
    %cst = arith.constant dense<0.000000e+00> : vector<8x128xf32>
    %10 = tpu.matmul %1, %9, %cst {dimension_numbers = #tpu.dot_dimension_numbers<[1], [0], [0], [1], [0, 0, 1, 1], [], []>} : vector<8x128xf32>, vector<128x128xf32>, vector<8x128xf32> -> vector<8x128xf32>
    %cst_9 = arith.constant dense<0xFF800000> : vector<128xf32>
    %11 = vector.multi_reduction <maximumf>, %10, %cst_9 [0] : vector<8x128xf32> to vector<128xf32>
    %12 = vector.shape_cast %11 : vector<128xf32> to vector<1x128xf32>
    %cst_10 = arith.constant 9.99999991E-38 : f32
    %13 = vector.broadcast %cst_10 : f32 to vector<1x128xf32>
    %14 = arith.maximumf %12, %13 : vector<1x128xf32>
    %15 = tpu.reciprocal %14 : vector<1x128xf32> -> vector<1x128xf32>
    %16 = vector.broadcast %15 : vector<1x128xf32> to vector<8x128xf32>
    %17 = arith.mulf %10, %16 : vector<8x128xf32>
    %18 = math.log %14 : vector<1x128xf32>
    %c1_i32 = arith.constant 1 : i32
    %cst_11 = arith.constant dense<0.000000e+00> : vector<8x128xf32>
    %19 = tpu.matmul %2, %17, %cst_11 {dimension_numbers = #tpu.dot_dimension_numbers<[1], [0], [0], [1], [0, 0, 1, 1], [], []>} : vector<8x8xf32>, vector<8x128xf32>, vector<8x128xf32> -> vector<8x128xf32>
    %20 = arith.index_cast %c1_i32 : i32 to index
    %c0_12 = arith.constant 0 : index
    %21 = vector.load %arg1[%20, %c0_12] : memref<8x128xi32, #tpu.memory_space<vmem>>, vector<1x128xi32>
    %22 = vector.broadcast %21 : vector<1x128xi32> to vector<128x128xi32>
    %23 = arith.cmpi eq, %4, %22 : vector<128x128xi32>
    %24 = arith.extui %23 : vector<128x128xi1> to vector<128x128xi32>
    %25 = arith.sitofp %24 : vector<128x128xi32> to vector<128x128xf32>
    %cst_13 = arith.constant dense<0.000000e+00> : vector<8x128xf32>
    %26 = tpu.matmul %0, %25, %cst_13 {dimension_numbers = #tpu.dot_dimension_numbers<[1], [0], [0], [1], [0, 0, 1, 1], [], []>} : vector<8x128xf32>, vector<128x128xf32>, vector<8x128xf32> -> vector<8x128xf32>
    %27 = arith.mulf %26, %19 : vector<8x128xf32>
    %cst_14 = arith.constant dense<0xFF800000> : vector<128xf32>
    %28 = vector.multi_reduction <maximumf>, %27, %cst_14 [0] : vector<8x128xf32> to vector<128xf32>
    %29 = vector.shape_cast %28 : vector<128xf32> to vector<1x128xf32>
    %cst_15 = arith.constant 9.99999991E-38 : f32
    %30 = vector.broadcast %cst_15 : f32 to vector<1x128xf32>
    %31 = arith.maximumf %29, %30 : vector<1x128xf32>
    %32 = tpu.reciprocal %31 : vector<1x128xf32> -> vector<1x128xf32>
    %33 = vector.broadcast %32 : vector<1x128xf32> to vector<8x128xf32>
    %34 = arith.mulf %27, %33 : vector<8x128xf32>
    %35 = math.log %31 : vector<1x128xf32>
    %36 = arith.addf %18, %35 : vector<1x128xf32>
    %c1_i32_16 = arith.constant 1 : i32
    %37 = arith.addi %c1_i32, %c1_i32_16 : i32
    %38 = vector.broadcast %37 : i32 to vector<1x128xi32>
    %39 = arith.cmpi eq, %3, %38 : vector<1x128xi32>
    %40 = vector.shape_cast %39 : vector<1x128xi1> to vector<1x128xi1>
    %41 = vector.broadcast %40 : vector<1x128xi1> to vector<8x128xi1>
    %42 = arith.select %41, %34, %17 : vector<8x128xi1>, vector<8x128xf32>
    %43 = arith.select %39, %36, %18 : vector<1x128xi1>, vector<1x128xf32>
    %c2_i32 = arith.constant 2 : i32
    %cst_17 = arith.constant dense<0.000000e+00> : vector<8x128xf32>
    %44 = tpu.matmul %2, %34, %cst_17 {dimension_numbers = #tpu.dot_dimension_numbers<[1], [0], [0], [1], [0, 0, 1, 1], [], []>} : vector<8x8xf32>, vector<8x128xf32>, vector<8x128xf32> -> vector<8x128xf32>
    %45 = arith.index_cast %c2_i32 : i32 to index
    %c0_18 = arith.constant 0 : index
    %46 = vector.load %arg1[%45, %c0_18] : memref<8x128xi32, #tpu.memory_space<vmem>>, vector<1x128xi32>
    %47 = vector.broadcast %46 : vector<1x128xi32> to vector<128x128xi32>
    %48 = arith.cmpi eq, %4, %47 : vector<128x128xi32>
    %49 = arith.extui %48 : vector<128x128xi1> to vector<128x128xi32>
    %50 = arith.sitofp %49 : vector<128x128xi32> to vector<128x128xf32>
    %cst_19 = arith.constant dense<0.000000e+00> : vector<8x128xf32>
    %51 = tpu.matmul %0, %50, %cst_19 {dimension_numbers = #tpu.dot_dimension_numbers<[1], [0], [0], [1], [0, 0, 1, 1], [], []>} : vector<8x128xf32>, vector<128x128xf32>, vector<8x128xf32> -> vector<8x128xf32>
    %52 = arith.mulf %51, %44 : vector<8x128xf32>
    %cst_20 = arith.constant dense<0xFF800000> : vector<128xf32>
    %53 = vector.multi_reduction <maximumf>, %52, %cst_20 [0] : vector<8x128xf32> to vector<128xf32>
    %54 = vector.shape_cast %53 : vector<128xf32> to vector<1x128xf32>
    %cst_21 = arith.constant 9.99999991E-38 : f32
    %55 = vector.broadcast %cst_21 : f32 to vector<1x128xf32>
    %56 = arith.maximumf %54, %55 : vector<1x128xf32>
    %57 = tpu.reciprocal %56 : vector<1x128xf32> -> vector<1x128xf32>
    %58 = vector.broadcast %57 : vector<1x128xf32> to vector<8x128xf32>
    %59 = arith.mulf %52, %58 : vector<8x128xf32>
    %60 = math.log %56 : vector<1x128xf32>
    %61 = arith.addf %36, %60 : vector<1x128xf32>
    %c1_i32_22 = arith.constant 1 : i32
    %62 = arith.addi %c2_i32, %c1_i32_22 : i32
    %63 = vector.broadcast %62 : i32 to vector<1x128xi32>
    %64 = arith.cmpi eq, %3, %63 : vector<1x128xi32>
    %65 = vector.shape_cast %64 : vector<1x128xi1> to vector<1x128xi1>
    %66 = vector.broadcast %65 : vector<1x128xi1> to vector<8x128xi1>
    %67 = arith.select %66, %59, %42 : vector<8x128xi1>, vector<8x128xf32>
    %68 = arith.select %64, %61, %43 : vector<1x128xi1>, vector<1x128xf32>
    %c3_i32 = arith.constant 3 : i32
    %cst_23 = arith.constant dense<0.000000e+00> : vector<8x128xf32>
    %69 = tpu.matmul %2, %59, %cst_23 {dimension_numbers = #tpu.dot_dimension_numbers<[1], [0], [0], [1], [0, 0, 1, 1], [], []>} : vector<8x8xf32>, vector<8x128xf32>, vector<8x128xf32> -> vector<8x128xf32>
    %70 = arith.index_cast %c3_i32 : i32 to index
    %c0_24 = arith.constant 0 : index
    %71 = vector.load %arg1[%70, %c0_24] : memref<8x128xi32, #tpu.memory_space<vmem>>, vector<1x128xi32>
    %72 = vector.broadcast %71 : vector<1x128xi32> to vector<128x128xi32>
    %73 = arith.cmpi eq, %4, %72 : vector<128x128xi32>
    %74 = arith.extui %73 : vector<128x128xi1> to vector<128x128xi32>
    %75 = arith.sitofp %74 : vector<128x128xi32> to vector<128x128xf32>
    %cst_25 = arith.constant dense<0.000000e+00> : vector<8x128xf32>
    %76 = tpu.matmul %0, %75, %cst_25 {dimension_numbers = #tpu.dot_dimension_numbers<[1], [0], [0], [1], [0, 0, 1, 1], [], []>} : vector<8x128xf32>, vector<128x128xf32>, vector<8x128xf32> -> vector<8x128xf32>
    %77 = arith.mulf %76, %69 : vector<8x128xf32>
    %cst_26 = arith.constant dense<0xFF800000> : vector<128xf32>
    %78 = vector.multi_reduction <maximumf>, %77, %cst_26 [0] : vector<8x128xf32> to vector<128xf32>
    %79 = vector.shape_cast %78 : vector<128xf32> to vector<1x128xf32>
    %cst_27 = arith.constant 9.99999991E-38 : f32
    %80 = vector.broadcast %cst_27 : f32 to vector<1x128xf32>
    %81 = arith.maximumf %79, %80 : vector<1x128xf32>
    %82 = tpu.reciprocal %81 : vector<1x128xf32> -> vector<1x128xf32>
    %83 = vector.broadcast %82 : vector<1x128xf32> to vector<8x128xf32>
    %84 = arith.mulf %77, %83 : vector<8x128xf32>
    %85 = math.log %81 : vector<1x128xf32>
    %86 = arith.addf %61, %85 : vector<1x128xf32>
    %c1_i32_28 = arith.constant 1 : i32
    %87 = arith.addi %c3_i32, %c1_i32_28 : i32
    %88 = vector.broadcast %87 : i32 to vector<1x128xi32>
    %89 = arith.cmpi eq, %3, %88 : vector<1x128xi32>
    %90 = vector.shape_cast %89 : vector<1x128xi1> to vector<1x128xi1>
    %91 = vector.broadcast %90 : vector<1x128xi1> to vector<8x128xi1>
    %92 = arith.select %91, %84, %67 : vector<8x128xi1>, vector<8x128xf32>
    %93 = arith.select %89, %86, %68 : vector<1x128xi1>, vector<1x128xf32>
    %c4_i32 = arith.constant 4 : i32
    %cst_29 = arith.constant dense<0.000000e+00> : vector<8x128xf32>
    %94 = tpu.matmul %2, %84, %cst_29 {dimension_numbers = #tpu.dot_dimension_numbers<[1], [0], [0], [1], [0, 0, 1, 1], [], []>} : vector<8x8xf32>, vector<8x128xf32>, vector<8x128xf32> -> vector<8x128xf32>
    %95 = arith.index_cast %c4_i32 : i32 to index
    %c0_30 = arith.constant 0 : index
    %96 = vector.load %arg1[%95, %c0_30] : memref<8x128xi32, #tpu.memory_space<vmem>>, vector<1x128xi32>
    %97 = vector.broadcast %96 : vector<1x128xi32> to vector<128x128xi32>
    %98 = arith.cmpi eq, %4, %97 : vector<128x128xi32>
    %99 = arith.extui %98 : vector<128x128xi1> to vector<128x128xi32>
    %100 = arith.sitofp %99 : vector<128x128xi32> to vector<128x128xf32>
    %cst_31 = arith.constant dense<0.000000e+00> : vector<8x128xf32>
    %101 = tpu.matmul %0, %100, %cst_31 {dimension_numbers = #tpu.dot_dimension_numbers<[1], [0], [0], [1], [0, 0, 1, 1], [], []>} : vector<8x128xf32>, vector<128x128xf32>, vector<8x128xf32> -> vector<8x128xf32>
    %102 = arith.mulf %101, %94 : vector<8x128xf32>
    %cst_32 = arith.constant dense<0xFF800000> : vector<128xf32>
    %103 = vector.multi_reduction <maximumf>, %102, %cst_32 [0] : vector<8x128xf32> to vector<128xf32>
    %104 = vector.shape_cast %103 : vector<128xf32> to vector<1x128xf32>
    %cst_33 = arith.constant 9.99999991E-38 : f32
    %105 = vector.broadcast %cst_33 : f32 to vector<1x128xf32>
    %106 = arith.maximumf %104, %105 : vector<1x128xf32>
    %107 = tpu.reciprocal %106 : vector<1x128xf32> -> vector<1x128xf32>
    %108 = vector.broadcast %107 : vector<1x128xf32> to vector<8x128xf32>
    %109 = arith.mulf %102, %108 : vector<8x128xf32>
    %110 = math.log %106 : vector<1x128xf32>
    %111 = arith.addf %86, %110 : vector<1x128xf32>
    %c1_i32_34 = arith.constant 1 : i32
    %112 = arith.addi %c4_i32, %c1_i32_34 : i32
    %113 = vector.broadcast %112 : i32 to vector<1x128xi32>
    %114 = arith.cmpi eq, %3, %113 : vector<1x128xi32>
    %115 = vector.shape_cast %114 : vector<1x128xi1> to vector<1x128xi1>
    %116 = vector.broadcast %115 : vector<1x128xi1> to vector<8x128xi1>
    %117 = arith.select %116, %109, %92 : vector<8x128xi1>, vector<8x128xf32>
    %118 = arith.select %114, %111, %93 : vector<1x128xi1>, vector<1x128xf32>
    %c5_i32 = arith.constant 5 : i32
    %cst_35 = arith.constant dense<0.000000e+00> : vector<8x128xf32>
    %119 = tpu.matmul %2, %109, %cst_35 {dimension_numbers = #tpu.dot_dimension_numbers<[1], [0], [0], [1], [0, 0, 1, 1], [], []>} : vector<8x8xf32>, vector<8x128xf32>, vector<8x128xf32> -> vector<8x128xf32>
    %120 = arith.index_cast %c5_i32 : i32 to index
    %c0_36 = arith.constant 0 : index
    %121 = vector.load %arg1[%120, %c0_36] : memref<8x128xi32, #tpu.memory_space<vmem>>, vector<1x128xi32>
    %122 = vector.broadcast %121 : vector<1x128xi32> to vector<128x128xi32>
    %123 = arith.cmpi eq, %4, %122 : vector<128x128xi32>
    %124 = arith.extui %123 : vector<128x128xi1> to vector<128x128xi32>
    %125 = arith.sitofp %124 : vector<128x128xi32> to vector<128x128xf32>
    %cst_37 = arith.constant dense<0.000000e+00> : vector<8x128xf32>
    %126 = tpu.matmul %0, %125, %cst_37 {dimension_numbers = #tpu.dot_dimension_numbers<[1], [0], [0], [1], [0, 0, 1, 1], [], []>} : vector<8x128xf32>, vector<128x128xf32>, vector<8x128xf32> -> vector<8x128xf32>
    %127 = arith.mulf %126, %119 : vector<8x128xf32>
    %cst_38 = arith.constant dense<0xFF800000> : vector<128xf32>
    %128 = vector.multi_reduction <maximumf>, %127, %cst_38 [0] : vector<8x128xf32> to vector<128xf32>
    %129 = vector.shape_cast %128 : vector<128xf32> to vector<1x128xf32>
    %cst_39 = arith.constant 9.99999991E-38 : f32
    %130 = vector.broadcast %cst_39 : f32 to vector<1x128xf32>
    %131 = arith.maximumf %129, %130 : vector<1x128xf32>
    %132 = tpu.reciprocal %131 : vector<1x128xf32> -> vector<1x128xf32>
    %133 = vector.broadcast %132 : vector<1x128xf32> to vector<8x128xf32>
    %134 = arith.mulf %127, %133 : vector<8x128xf32>
    %135 = math.log %131 : vector<1x128xf32>
    %136 = arith.addf %111, %135 : vector<1x128xf32>
    %c1_i32_40 = arith.constant 1 : i32
    %137 = arith.addi %c5_i32, %c1_i32_40 : i32
    %138 = vector.broadcast %137 : i32 to vector<1x128xi32>
    %139 = arith.cmpi eq, %3, %138 : vector<1x128xi32>
    %140 = vector.shape_cast %139 : vector<1x128xi1> to vector<1x128xi1>
    %141 = vector.broadcast %140 : vector<1x128xi1> to vector<8x128xi1>
    %142 = arith.select %141, %134, %117 : vector<8x128xi1>, vector<8x128xf32>
    %143 = arith.select %139, %136, %118 : vector<1x128xi1>, vector<1x128xf32>
    %c6_i32 = arith.constant 6 : i32
    %cst_41 = arith.constant dense<0.000000e+00> : vector<8x128xf32>
    %144 = tpu.matmul %2, %134, %cst_41 {dimension_numbers = #tpu.dot_dimension_numbers<[1], [0], [0], [1], [0, 0, 1, 1], [], []>} : vector<8x8xf32>, vector<8x128xf32>, vector<8x128xf32> -> vector<8x128xf32>
    %145 = arith.index_cast %c6_i32 : i32 to index
    %c0_42 = arith.constant 0 : index
    %146 = vector.load %arg1[%145, %c0_42] : memref<8x128xi32, #tpu.memory_space<vmem>>, vector<1x128xi32>
    %147 = vector.broadcast %146 : vector<1x128xi32> to vector<128x128xi32>
    %148 = arith.cmpi eq, %4, %147 : vector<128x128xi32>
    %149 = arith.extui %148 : vector<128x128xi1> to vector<128x128xi32>
    %150 = arith.sitofp %149 : vector<128x128xi32> to vector<128x128xf32>
    %cst_43 = arith.constant dense<0.000000e+00> : vector<8x128xf32>
    %151 = tpu.matmul %0, %150, %cst_43 {dimension_numbers = #tpu.dot_dimension_numbers<[1], [0], [0], [1], [0, 0, 1, 1], [], []>} : vector<8x128xf32>, vector<128x128xf32>, vector<8x128xf32> -> vector<8x128xf32>
    %152 = arith.mulf %151, %144 : vector<8x128xf32>
    %cst_44 = arith.constant dense<0xFF800000> : vector<128xf32>
    %153 = vector.multi_reduction <maximumf>, %152, %cst_44 [0] : vector<8x128xf32> to vector<128xf32>
    %154 = vector.shape_cast %153 : vector<128xf32> to vector<1x128xf32>
    %cst_45 = arith.constant 9.99999991E-38 : f32
    %155 = vector.broadcast %cst_45 : f32 to vector<1x128xf32>
    %156 = arith.maximumf %154, %155 : vector<1x128xf32>
    %157 = tpu.reciprocal %156 : vector<1x128xf32> -> vector<1x128xf32>
    %158 = vector.broadcast %157 : vector<1x128xf32> to vector<8x128xf32>
    %159 = arith.mulf %152, %158 : vector<8x128xf32>
    %160 = math.log %156 : vector<1x128xf32>
    %161 = arith.addf %136, %160 : vector<1x128xf32>
    %c1_i32_46 = arith.constant 1 : i32
    %162 = arith.addi %c6_i32, %c1_i32_46 : i32
    %163 = vector.broadcast %162 : i32 to vector<1x128xi32>
    %164 = arith.cmpi eq, %3, %163 : vector<1x128xi32>
    %165 = vector.shape_cast %164 : vector<1x128xi1> to vector<1x128xi1>
    %166 = vector.broadcast %165 : vector<1x128xi1> to vector<8x128xi1>
    %167 = arith.select %166, %159, %142 : vector<8x128xi1>, vector<8x128xf32>
    %168 = arith.select %164, %161, %143 : vector<1x128xi1>, vector<1x128xf32>
    %c7_i32 = arith.constant 7 : i32
    %cst_47 = arith.constant dense<0.000000e+00> : vector<8x128xf32>
    %169 = tpu.matmul %2, %159, %cst_47 {dimension_numbers = #tpu.dot_dimension_numbers<[1], [0], [0], [1], [0, 0, 1, 1], [], []>} : vector<8x8xf32>, vector<8x128xf32>, vector<8x128xf32> -> vector<8x128xf32>
    %170 = arith.index_cast %c7_i32 : i32 to index
    %c0_48 = arith.constant 0 : index
    %171 = vector.load %arg1[%170, %c0_48] : memref<8x128xi32, #tpu.memory_space<vmem>>, vector<1x128xi32>
    %172 = vector.broadcast %171 : vector<1x128xi32> to vector<128x128xi32>
    %173 = arith.cmpi eq, %4, %172 : vector<128x128xi32>
    %174 = arith.extui %173 : vector<128x128xi1> to vector<128x128xi32>
    %175 = arith.sitofp %174 : vector<128x128xi32> to vector<128x128xf32>
    %cst_49 = arith.constant dense<0.000000e+00> : vector<8x128xf32>
    %176 = tpu.matmul %0, %175, %cst_49 {dimension_numbers = #tpu.dot_dimension_numbers<[1], [0], [0], [1], [0, 0, 1, 1], [], []>} : vector<8x128xf32>, vector<128x128xf32>, vector<8x128xf32> -> vector<8x128xf32>
    %177 = arith.mulf %176, %169 : vector<8x128xf32>
    %cst_50 = arith.constant dense<0xFF800000> : vector<128xf32>
    %178 = vector.multi_reduction <maximumf>, %177, %cst_50 [0] : vector<8x128xf32> to vector<128xf32>
    %179 = vector.shape_cast %178 : vector<128xf32> to vector<1x128xf32>
    %cst_51 = arith.constant 9.99999991E-38 : f32
    %180 = vector.broadcast %cst_51 : f32 to vector<1x128xf32>
    %181 = arith.maximumf %179, %180 : vector<1x128xf32>
    %182 = tpu.reciprocal %181 : vector<1x128xf32> -> vector<1x128xf32>
    %183 = vector.broadcast %182 : vector<1x128xf32> to vector<8x128xf32>
    %184 = arith.mulf %177, %183 : vector<8x128xf32>
    %185 = math.log %181 : vector<1x128xf32>
    %186 = arith.addf %161, %185 : vector<1x128xf32>
    %c1_i32_52 = arith.constant 1 : i32
    %187 = arith.addi %c7_i32, %c1_i32_52 : i32
    %188 = vector.broadcast %187 : i32 to vector<1x128xi32>
    %189 = arith.cmpi eq, %3, %188 : vector<1x128xi32>
    %190 = vector.shape_cast %189 : vector<1x128xi1> to vector<1x128xi1>
    %191 = vector.broadcast %190 : vector<1x128xi1> to vector<8x128xi1>
    %192 = arith.select %191, %184, %167 : vector<8x128xi1>, vector<8x128xf32>
    %193 = arith.select %189, %186, %168 : vector<1x128xi1>, vector<1x128xf32>
    %c7_i32_53 = arith.constant 7 : i32
    %cst_54 = arith.constant dense<0.000000e+00> : vector<128xf32>
    %194 = vector.multi_reduction <add>, %192, %cst_54 [0] : vector<8x128xf32> to vector<128xf32>
    %195 = vector.shape_cast %194 : vector<128xf32> to vector<1x128xf32>
    %196 = math.log %195 : vector<1x128xf32>
    %197 = arith.addf %193, %196 : vector<1x128xf32>
    %c0_55 = arith.constant 0 : index
    %c0_56 = arith.constant 0 : index
    %198 = vector.load %arg6[%c0_55, %c0_56] : memref<1x128xf32, #tpu.memory_space<vmem>>, vector<1x128xf32>
    tpu.vector_store %arg6[%c0_55, %c0_56], %197 {strides = array<i32>} : memref<1x128xf32, #tpu.memory_space<vmem>>, vector<1x128xf32>,
    return
  }
  func.func @transform_0(%arg0: i32) -> (i32, i32) {
    %c0_i32 = arith.constant 0 : i32
    %c0_i32_0 = arith.constant 0 : i32
    return %c0_i32, %arg0 : i32, i32
  }
  func.func @transform_1(%arg0: i32) -> (i32, i32) {
    %c0_i32 = arith.constant 0 : i32
    %c0_i32_0 = arith.constant 0 : i32
    %c0_i32_1 = arith.constant 0 : i32
    return %c0_i32, %c0_i32_0 : i32, i32
  }
  func.func @transform_2(%arg0: i32) -> (i32, i32) {
    %c0_i32 = arith.constant 0 : i32
    %c0_i32_0 = arith.constant 0 : i32
    %c0_i32_1 = arith.constant 0 : i32
    return %c0_i32, %c0_i32_0 : i32, i32
  }
  func.func @transform_3(%arg0: i32) -> (i32, i32) {
    %c0_i32 = arith.constant 0 : i32
    %c0_i32_0 = arith.constant 0 : i32
    %c0_i32_1 = arith.constant 0 : i32
    return %c0_i32, %c0_i32_0 : i32, i32
  }
  func.func @transform_4(%arg0: i32) -> (i32, i32) {
    %c0_i32 = arith.constant 0 : i32
    %c0_i32_0 = arith.constant 0 : i32
    return %c0_i32, %arg0 : i32, i32
  }
  func.func @transform_5(%arg0: i32) -> (i32, i32) {
    %c0_i32 = arith.constant 0 : i32
    %c0_i32_0 = arith.constant 0 : i32
    return %c0_i32, %arg0 : i32, i32
  }
}

</mosaic_0001>

<llo_original>
// kernel: tpu_custom_call.1
$region0: #{tpu_custom_call.1}
  #allocation0 [shape = 'u32[]', space=smem, size = 0x4, offset = 0x4, fixed_abs, tag = 'smem constant byte address 0x4 - core index']
  #allocation1 [shape = 'u32[144,128]{1,0:T(1,128)}', space=vmem, size = 0x12000, scoped, tag = 'internal scratch']
  %s0 = inlined_call_operand.hbm [shape: s32[8,128], index: 0, kind: input, shape index: {}]
  %s1 = inlined_call_operand.hbm [shape: f32[8,128], index: 1, kind: input, shape index: {}]
  %s2 = inlined_call_operand.hbm [shape: f32[8,128], index: 2, kind: input, shape index: {}]
  %s3 = inlined_call_operand.hbm [shape: f32[8,8], index: 3, kind: input, shape index: {}]
  %s4 = inlined_call_operand.hbm [shape: s32[1,128], index: 4, kind: input, shape index: {}]
  %s5 = inlined_call_operand.hbm [shape: f32[1,128], index: 5, kind: output, shape index: {}]
  %s6 = sld [smem:[#allocation0]]
  $region50: #{tpu_custom_call.1} parent=0
    _
  %s8 = ssub.s32 1, %s6
  %s9 = scalar_select 0, %s8, %s6
  $region1: #{tpu_custom_call.1} parent=0
    #allocation2 [shape = 'u8[4096]{0}', space=vmem, size = 0x1000, scoped, tag = 'input window, operand 0, single buffered']
    #allocation3 [shape = 's32[1]{0}', space=sflag, size = 0x4, scoped, tag = 'scoped memory for tpu_custom_call.1']
    #allocation4 [shape = 's32[1]{0}', space=sflag, size = 0x4, scoped, tag = 'scoped memory for tpu_custom_call.1']
    #allocation5 [shape = 'u8[4096]{0}', space=vmem, size = 0x1000, scoped, tag = 'input window, operand 1, single buffered']
    #allocation6 [shape = 's32[1]{0}', space=sflag, size = 0x4, scoped, tag = 'scoped memory for tpu_custom_call.1']
    #allocation7 [shape = 'u8[4096]{0}', space=vmem, size = 0x1000, scoped, tag = 'input window, operand 2, single buffered']
    #allocation8 [shape = 'u8[4096]{0}', space=vmem, size = 0x1000, scoped, tag = 'input window, operand 3, single buffered']
    #allocation9 [shape = 's32[1]{0}', space=sflag, size = 0x4, scoped, tag = 'scoped memory for tpu_custom_call.1']
    #allocation10 [shape = 'u8[512]{0}', space=vmem, size = 0x400, scoped, tag = 'input window, operand 4, single buffered']
    #allocation11 [shape = 'u8[512]{0}', space=vmem, size = 0x400, scoped, tag = 'output window, operand 0, single buffered']
    %10 = vsyncpa [#allocation3], 0
    %11 = vsyncpa [#allocation6], 0
    %12 = vsyncpa [#allocation9], 0
    %13 = vsyncpa [#allocation4], 0
    // Predicated region
    $region2: #{tpu_custom_call.1} parent=1 // pred_check
      _
    $region3: #{tpu_custom_call.1} parent=1 // pred_check_branch
      %15 = sbr.rel (0) target = $region5
    $region4: #{tpu_custom_call.1} parent=1 // pred_region
      %s17 = ssub.s32 128, 128
      %18 = vsyncadd [#allocation3], %s17
      %s20 = sshll.u32 [#allocation2], 4
      %s21 = int_to_ptr.vmem [resolvable:$true] %s20
      %23 = dma.hbm_to_vmem [thread:$0]  %s0, 128, %s21, [#allocation3]
    $region5: #{tpu_custom_call.1} parent=1 // pred_fallthru
      _
    // Predicated region
    $region6: #{tpu_custom_call.1} parent=1 // pred_check
      _
    $region7: #{tpu_custom_call.1} parent=1 // pred_check_branch
      %25 = sbr.rel (0) target = $region9
    $region8: #{tpu_custom_call.1} parent=1 // pred_region
      %s27 = ssub.s32 128, 128
      %28 = vsyncadd [#allocation6], %s27
      %s30 = sshll.u32 [#allocation5], 4
      %s31 = int_to_ptr.vmem [resolvable:$true] %s30
      %33 = dma.hbm_to_vmem [thread:$0]  %s1, 128, %s31, [#allocation6]
    $region9: #{tpu_custom_call.1} parent=1 // pred_fallthru
      _
    // Predicated region
    $region10: #{tpu_custom_call.1} parent=1 // pred_check
      _
    $region11: #{tpu_custom_call.1} parent=1 // pred_check_branch
      %35 = sbr.rel (0) target = $region13
    $region12: #{tpu_custom_call.1} parent=1 // pred_region
      %s37 = ssub.s32 128, 128
      %38 = vsyncadd [#allocation6], %s37
      %s40 = sshll.u32 [#allocation7], 4
      %s41 = int_to_ptr.vmem [resolvable:$true] %s40
      %43 = dma.hbm_to_vmem [thread:$0]  %s2, 128, %s41, [#allocation6]
    $region13: #{tpu_custom_call.1} parent=1 // pred_fallthru
      _
    // Predicated region
    $region14: #{tpu_custom_call.1} parent=1 // pred_check
      _
    $region15: #{tpu_custom_call.1} parent=1 // pred_check_branch
      %45 = sbr.rel (0) target = $region17
    $region16: #{tpu_custom_call.1} parent=1 // pred_region
      %s47 = ssub.s32 128, 128
      %48 = vsyncadd [#allocation9], %s47
      %s50 = sshll.u32 [#allocation8], 4
      %s51 = int_to_ptr.vmem [resolvable:$true] %s50
      %53 = dma.hbm_to_vmem [thread:$0]  %s3, 128, %s51, [#allocation9]
    $region17: #{tpu_custom_call.1} parent=1 // pred_fallthru
      _
    // Predicated region
    $region18: #{tpu_custom_call.1} parent=1 // pred_check
      _
    $region19: #{tpu_custom_call.1} parent=1 // pred_check_branch
      %55 = sbr.rel (0) target = $region21
    $region20: #{tpu_custom_call.1} parent=1 // pred_region
      %s57 = ssub.s32 16, 16
      %58 = vsyncadd [#allocation9], %s57
      %s60 = sshll.u32 [#allocation10], 4
      %s61 = int_to_ptr.vmem [resolvable:$true] %s60
      %63 = dma.hbm_to_vmem [thread:$0]  %s4, 16, %s61, [#allocation9]
    $region21: #{tpu_custom_call.1} parent=1 // pred_fallthru
      _
    // Predicated region
    $region22: #{tpu_custom_call.1} parent=1 // pred_check
      _
    $region23: #{tpu_custom_call.1} parent=1 // pred_check_branch
      %65 = sbr.rel (0) target = $region25
    $region24: #{tpu_custom_call.1} parent=1 // pred_region
      %66 = dma.done [#allocation3], 128
    $region25: #{tpu_custom_call.1} parent=1 // pred_fallthru
      _
    // Predicated region
    $region26: #{tpu_custom_call.1} parent=1 // pred_check
      _
    $region27: #{tpu_custom_call.1} parent=1 // pred_check_branch
      %68 = sbr.rel (0) target = $region29
    $region28: #{tpu_custom_call.1} parent=1 // pred_region
      %69 = dma.done [#allocation6], 128
    $region29: #{tpu_custom_call.1} parent=1 // pred_fallthru
      _
    // Predicated region
    $region30: #{tpu_custom_call.1} parent=1 // pred_check
      _
    $region31: #{tpu_custom_call.1} parent=1 // pred_check_branch
      %71 = sbr.rel (0) target = $region33
    $region32: #{tpu_custom_call.1} parent=1 // pred_region
      %72 = dma.done [#allocation6], 128
    $region33: #{tpu_custom_call.1} parent=1 // pred_fallthru
      _
    // Predicated region
    $region34: #{tpu_custom_call.1} parent=1 // pred_check
      _
    $region35: #{tpu_custom_call.1} parent=1 // pred_check_branch
      %74 = sbr.rel (0) target = $region37
    $region36: #{tpu_custom_call.1} parent=1 // pred_region
      %75 = dma.done [#allocation9], 128
    $region37: #{tpu_custom_call.1} parent=1 // pred_fallthru
      _
    // Predicated region
    $region38: #{tpu_custom_call.1} parent=1 // pred_check
      _
    $region39: #{tpu_custom_call.1} parent=1 // pred_check_branch
      %77 = sbr.rel (0) target = $region41
    $region40: #{tpu_custom_call.1} parent=1 // pred_region
      %78 = dma.done [#allocation9], 16
    $region41: #{tpu_custom_call.1} parent=1 // pred_fallthru
      _
    %v79 = vld [vmem:[#allocation5] sm:$0xff]
    %v80 = vld [vmem:[#allocation7] sm:$0xff]
    %v81 = vld [vmem:[#allocation8] sm:$0xff]
    %v82 = vld [vmem:[#allocation10] sm:$0x1]
    %v83 = vlaneseq
    %v84 = vshrl.u32 %v83, 7
    %v85 = vadd.s32 %v84, 8
    %v86 = vadd.s32 %v84, 16
    %v87 = vadd.s32 %v84, 24
    %v88 = vadd.s32 %v84, 32
    %v89 = vadd.s32 %v84, 40
    %v90 = vadd.s32 %v84, 48
    %v91 = vadd.s32 %v84, 56
    %v92 = vadd.s32 %v84, 64
    %v93 = vadd.s32 %v84, 72
    %v94 = vadd.s32 %v84, 80
    %v95 = vadd.s32 %v84, 88
    %v96 = vadd.s32 %v84, 96
    %v97 = vadd.s32 %v84, 104
    %v98 = vadd.s32 %v84, 112
    %v99 = vadd.s32 %v84, 120
    %v100 = vld [vmem:[#allocation2] sm:$0x1]
    %v101 = vlaneseq
    %v102 = vshrl.u32 %v101, 7
    %v103 = vsub.s32 0, %v102
    %v104 = vrot.slane %v100, %v103
    %vm105 = vcmp.eq.s32.totalorder %v84, %v104
    %vm106 = vcmp.eq.s32.totalorder %v85, %v104
    %vm107 = vcmp.eq.s32.totalorder %v86, %v104
    %vm108 = vcmp.eq.s32.totalorder %v87, %v104
    %vm109 = vcmp.eq.s32.totalorder %v88, %v104
    %vm110 = vcmp.eq.s32.totalorder %v89, %v104
    %vm111 = vcmp.eq.s32.totalorder %v90, %v104
    %vm112 = vcmp.eq.s32.totalorder %v91, %v104
    %vm113 = vcmp.eq.s32.totalorder %v92, %v104
    %vm114 = vcmp.eq.s32.totalorder %v93, %v104
    %vm115 = vcmp.eq.s32.totalorder %v94, %v104
    %vm116 = vcmp.eq.s32.totalorder %v95, %v104
    %vm117 = vcmp.eq.s32.totalorder %v96, %v104
    %vm118 = vcmp.eq.s32.totalorder %v97, %v104
    %vm119 = vcmp.eq.s32.totalorder %v98, %v104
    %vm120 = vcmp.eq.s32.totalorder %v99, %v104
    %v121 = vsel %vm105, 1, 0
    %v122 = vsel %vm106, 1, 0
    %v123 = vsel %vm107, 1, 0
    %v124 = vsel %vm108, 1, 0
    %v125 = vsel %vm109, 1, 0
    %v126 = vsel %vm110, 1, 0
    %v127 = vsel %vm111, 1, 0
    %v128 = vsel %vm112, 1, 0
    %v129 = vsel %vm113, 1, 0
    %v130 = vsel %vm114, 1, 0
    %v131 = vsel %vm115, 1, 0
    %v132 = vsel %vm116, 1, 0
    %v133 = vsel %vm117, 1, 0
    %v134 = vsel %vm118, 1, 0
    %v135 = vsel %vm119, 1, 0
    %v136 = vsel %vm120, 1, 0
    %v137 = vcvt.s32.f32 %v121
    %v138 = vcvt.s32.f32 %v122
    %v139 = vcvt.s32.f32 %v123
    %v140 = vcvt.s32.f32 %v124
    %v141 = vcvt.s32.f32 %v125
    %v142 = vcvt.s32.f32 %v126
    %v143 = vcvt.s32.f32 %v127
    %v144 = vcvt.s32.f32 %v128
    %v145 = vcvt.s32.f32 %v129
    %v146 = vcvt.s32.f32 %v130
    %v147 = vcvt.s32.f32 %v131
    %v148 = vcvt.s32.f32 %v132
    %v149 = vcvt.s32.f32 %v133
    %v150 = vcvt.s32.f32 %v134
    %v151 = vcvt.s32.f32 %v135
    %v152 = vcvt.s32.f32 %v136
    %153 = vmatprep.subr.mxu0 0.0
    %154 = vmatpush1.msra.mxu0 %v137
    %155 = vmatprep.subr.mxu0 0.0
    %156 = vmatpush1.msra.mxu0 %v138
    %157 = vmatprep.subr.mxu0 0.0
    %158 = vmatpush1.msra.mxu0 %v139
    %159 = vmatprep.subr.mxu0 0.0
    %160 = vmatpush1.msra.mxu0 %v140
    %161 = vmatprep.subr.mxu0 0.0
    %162 = vmatpush1.msra.mxu0 %v141
    %163 = vmatprep.subr.mxu0 0.0
    %164 = vmatpush1.msra.mxu0 %v142
    %165 = vmatprep.subr.mxu0 0.0
    %166 = vmatpush1.msra.mxu0 %v143
    %167 = vmatprep.subr.mxu0 0.0
    %168 = vmatpush1.msra.mxu0 %v144
    %169 = vmatprep.subr.mxu0 0.0
    %170 = vmatpush1.msra.mxu0 %v145
    %171 = vmatprep.subr.mxu0 0.0
    %172 = vmatpush1.msra.mxu0 %v146
    %173 = vmatprep.subr.mxu0 0.0
    %174 = vmatpush1.msra.mxu0 %v147
    %175 = vmatprep.subr.mxu0 0.0
    %176 = vmatpush1.msra.mxu0 %v148
    %177 = vmatprep.subr.mxu0 0.0
    %178 = vmatpush1.msra.mxu0 %v149
    %179 = vmatprep.subr.mxu0 0.0
    %180 = vmatpush1.msra.mxu0 %v150
    %181 = vmatprep.subr.mxu0 0.0
    %182 = vmatpush1.msra.mxu0 %v151
    %183 = vmatprep.subr.mxu0 0.0
    %184 = vmatpush1.msra.mxu0 %v152
    %185 = vmatprep.subr.mxu0 0.0
    %186 = vmatpush1.msra.mxu0 0.0
    %187 = vmatprep.subr.mxu0 0.0
    %188 = vmatpush1.msra.mxu0 0.0
    %189 = vmatprep.subr.mxu0 0.0
    %190 = vmatpush1.msra.mxu0 0.0
    %191 = vmatprep.subr.mxu0 0.0
    %192 = vmatpush1.msra.mxu0 0.0
    %193 = vmatprep.subr.mxu0 0.0
    %194 = vmatpush1.msra.mxu0 0.0
    %195 = vmatprep.subr.mxu0 0.0
    %196 = vmatpush1.msra.mxu0 0.0
    %197 = vmatprep.subr.mxu0 0.0
    %198 = vmatpush1.msra.mxu0 0.0
    %199 = vmatprep.subr.mxu0 0.0
    %200 = vmatpush1.msra.mxu0 0.0
    %201 = vmatprep.subr.mxu0 0.0
    %202 = vmatpush1.msra.mxu0 0.0
    %203 = vmatprep.subr.mxu0 0.0
    %204 = vmatpush1.msra.mxu0 0.0
    %205 = vmatprep.subr.mxu0 0.0
    %206 = vmatpush1.msra.mxu0 0.0
    %207 = vmatprep.subr.mxu0 0.0
    %208 = vmatpush1.msra.mxu0 0.0
    %209 = vmatprep.subr.mxu0 0.0
    %210 = vmatpush1.msra.mxu0 0.0
    %211 = vmatprep.subr.mxu0 0.0
    %212 = vmatpush1.msra.mxu0 0.0
    %213 = vmatprep.subr.mxu0 0.0
    %214 = vmatpush1.msra.mxu0 0.0
    %215 = vmatprep.subr.mxu0 0.0
    %216 = vmatpush1.msra.mxu0 0.0
    %217 = vmatprep.mubr.f32.mxu0 0.0
    %218 = vmatmul.mubr.f32.gmra.mrb[0].mxu0 %v80
    %v219 = vpop.f32.mrb[0].mxu0
    %v220 = vadd.f32 0.0, %v219
    %v221 = vpop.f32.mrb[0].mxu0
    %222 = vdwg.mxu0
    %v223 = vrot.slane %v220, 4
    %v224 = vmax.f32 %v220, %v223
    %v225 = vrot.slane %v224, 2
    %v226 = vmax.f32 %v224, %v225
    %v227 = vrot.slane %v226, 1
    %v228 = vmax.f32 %v226, %v227
    %v229 = vmax.f32 %v228, 1e-37
    %v230 = vrcp.pop %v229
    %v231 = vmul.f32 %v220, %v230
    %v232 = vlog2.pop %v229
    %v233 = vmul.f32 %v232, 0.6931472
    %vm234 = vcmask 64512
    %v236 = vsel %vm234, %v81, 0
    %238 = vmatprep.subr.mxu0 0.0
    %239 = vmatpush1.msra.mxu0 %v231
    %240 = vmatprep.subr.mxu0 0.0
    %241 = vmatpush1.msra.mxu0 0.0
    %242 = vmatprep.subr.mxu0 0.0
    %243 = vmatpush1.msra.mxu0 0.0
    %244 = vmatprep.subr.mxu0 0.0
    %245 = vmatpush1.msra.mxu0 0.0
    %246 = vmatprep.subr.mxu0 0.0
    %247 = vmatpush1.msra.mxu0 0.0
    %248 = vmatprep.subr.mxu0 0.0
    %249 = vmatpush1.msra.mxu0 0.0
    %250 = vmatprep.subr.mxu0 0.0
    %251 = vmatpush1.msra.mxu0 0.0
    %252 = vmatprep.subr.mxu0 0.0
    %253 = vmatpush1.msra.mxu0 0.0
    %254 = vmatprep.subr.mxu0 0.0
    %255 = vmatpush1.msra.mxu0 0.0
    %256 = vmatprep.subr.mxu0 0.0
    %257 = vmatpush1.msra.mxu0 0.0
    %258 = vmatprep.subr.mxu0 0.0
    %259 = vmatpush1.msra.mxu0 0.0
    %260 = vmatprep.subr.mxu0 0.0
    %261 = vmatpush1.msra.mxu0 0.0
    %262 = vmatprep.subr.mxu0 0.0
    %263 = vmatpush1.msra.mxu0 0.0
    %264 = vmatprep.subr.mxu0 0.0
    %265 = vmatpush1.msra.mxu0 0.0
    %266 = vmatprep.subr.mxu0 0.0
    %267 = vmatpush1.msra.mxu0 0.0
    %268 = vmatprep.subr.mxu0 0.0
    %269 = vmatpush1.msra.mxu0 0.0
    %270 = vmatprep.subr.mxu0 0.0
    %271 = vmatpush1.msra.mxu0 0.0
    %272 = vmatprep.subr.mxu0 0.0
    %273 = vmatpush1.msra.mxu0 0.0
    %274 = vmatprep.subr.mxu0 0.0
    %275 = vmatpush1.msra.mxu0 0.0
    %276 = vmatprep.subr.mxu0 0.0
    %277 = vmatpush1.msra.mxu0 0.0
    %278 = vmatprep.subr.mxu0 0.0
    %279 = vmatpush1.msra.mxu0 0.0
    %280 = vmatprep.subr.mxu0 0.0
    %281 = vmatpush1.msra.mxu0 0.0
    %282 = vmatprep.subr.mxu0 0.0
    %283 = vmatpush1.msra.mxu0 0.0
    %284 = vmatprep.subr.mxu0 0.0
    %285 = vmatpush1.msra.mxu0 0.0
    %286 = vmatprep.subr.mxu0 0.0
    %287 = vmatpush1.msra.mxu0 0.0
    %288 = vmatprep.subr.mxu0 0.0
    %289 = vmatpush1.msra.mxu0 0.0
    %290 = vmatprep.subr.mxu0 0.0
    %291 = vmatpush1.msra.mxu0 0.0
    %292 = vmatprep.subr.mxu0 0.0
    %293 = vmatpush1.msra.mxu0 0.0
    %294 = vmatprep.subr.mxu0 0.0
    %295 = vmatpush1.msra.mxu0 0.0
    %296 = vmatprep.subr.mxu0 0.0
    %297 = vmatpush1.msra.mxu0 0.0
    %298 = vmatprep.subr.mxu0 0.0
    %299 = vmatpush1.msra.mxu0 0.0
    %300 = vmatprep.subr.mxu0 0.0
    %301 = vmatpush1.msra.mxu0 0.0
    %302 = vmatprep.mubr.f32.mxu0 0.0
    %303 = vmatmul.mubr.f32.gmra.mrb[0].mxu0 %v236
    %v304 = vpop.f32.mrb[0].mxu0
    %v305 = vadd.f32 0.0, %v304
    %v306 = vpop.f32.mrb[0].mxu0
    %307 = vdwg.mxu0
    %v308 = vld [vmem:[#allocation2 + $0x1] sm:$0x1]
    %v309 = vlaneseq
    %v310 = vshrl.u32 %v309, 7
    %v311 = vsub.s32 0, %v310
    %v312 = vrot.slane %v308, %v311
    %vm313 = vcmp.eq.s32.totalorder %v84, %v312
    %vm314 = vcmp.eq.s32.totalorder %v85, %v312
    %vm315 = vcmp.eq.s32.totalorder %v86, %v312
    %vm316 = vcmp.eq.s32.totalorder %v87, %v312
    %vm317 = vcmp.eq.s32.totalorder %v88, %v312
    %vm318 = vcmp.eq.s32.totalorder %v89, %v312
    %vm319 = vcmp.eq.s32.totalorder %v90, %v312
    %vm320 = vcmp.eq.s32.totalorder %v91, %v312
    %vm321 = vcmp.eq.s32.totalorder %v92, %v312
    %vm322 = vcmp.eq.s32.totalorder %v93, %v312
    %vm323 = vcmp.eq.s32.totalorder %v94, %v312
    %vm324 = vcmp.eq.s32.totalorder %v95, %v312
    %vm325 = vcmp.eq.s32.totalorder %v96, %v312
    %vm326 = vcmp.eq.s32.totalorder %v97, %v312
    %vm327 = vcmp.eq.s32.totalorder %v98, %v312
    %vm328 = vcmp.eq.s32.totalorder %v99, %v312
    %v329 = vsel %vm313, 1, 0
    %v330 = vsel %vm314, 1, 0
    %v331 = vsel %vm315, 1, 0
    %v332 = vsel %vm316, 1, 0
    %v333 = vsel %vm317, 1, 0
    %v334 = vsel %vm318, 1, 0
    %v335 = vsel %vm319, 1, 0
    %v336 = vsel %vm320, 1, 0
    %v337 = vsel %vm321, 1, 0
    %v338 = vsel %vm322, 1, 0
    %v339 = vsel %vm323, 1, 0
    %v340 = vsel %vm324, 1, 0
    %v341 = vsel %vm325, 1, 0
    %v342 = vsel %vm326, 1, 0
    %v343 = vsel %vm327, 1, 0
    %v344 = vsel %vm328, 1, 0
    %v345 = vcvt.s32.f32 %v329
    %v346 = vcvt.s32.f32 %v330
    %v347 = vcvt.s32.f32 %v331
    %v348 = vcvt.s32.f32 %v332
    %v349 = vcvt.s32.f32 %v333
    %v350 = vcvt.s32.f32 %v334
    %v351 = vcvt.s32.f32 %v335
    %v352 = vcvt.s32.f32 %v336
    %v353 = vcvt.s32.f32 %v337
    %v354 = vcvt.s32.f32 %v338
    %v355 = vcvt.s32.f32 %v339
    %v356 = vcvt.s32.f32 %v340
    %v357 = vcvt.s32.f32 %v341
    %v358 = vcvt.s32.f32 %v342
    %v359 = vcvt.s32.f32 %v343
    %v360 = vcvt.s32.f32 %v344
    %361 = vmatprep.subr.mxu0 0.0
    %362 = vmatpush1.msra.mxu0 %v345
    %363 = vmatprep.subr.mxu0 0.0
    %364 = vmatpush1.msra.mxu0 %v346
    %365 = vmatprep.subr.mxu0 0.0
    %366 = vmatpush1.msra.mxu0 %v347
    %367 = vmatprep.subr.mxu0 0.0
    %368 = vmatpush1.msra.mxu0 %v348
    %369 = vmatprep.subr.mxu0 0.0
    %370 = vmatpush1.msra.mxu0 %v349
    %371 = vmatprep.subr.mxu0 0.0
    %372 = vmatpush1.msra.mxu0 %v350
    %373 = vmatprep.subr.mxu0 0.0
    %374 = vmatpush1.msra.mxu0 %v351
    %375 = vmatprep.subr.mxu0 0.0
    %376 = vmatpush1.msra.mxu0 %v352
    %377 = vmatprep.subr.mxu0 0.0
    %378 = vmatpush1.msra.mxu0 %v353
    %379 = vmatprep.subr.mxu0 0.0
    %380 = vmatpush1.msra.mxu0 %v354
    %381 = vmatprep.subr.mxu0 0.0
    %382 = vmatpush1.msra.mxu0 %v355
    %383 = vmatprep.subr.mxu0 0.0
    %384 = vmatpush1.msra.mxu0 %v356
    %385 = vmatprep.subr.mxu0 0.0
    %386 = vmatpush1.msra.mxu0 %v357
    %387 = vmatprep.subr.mxu0 0.0
    %388 = vmatpush1.msra.mxu0 %v358
    %389 = vmatprep.subr.mxu0 0.0
    %390 = vmatpush1.msra.mxu0 %v359
    %391 = vmatprep.subr.mxu0 0.0
    %392 = vmatpush1.msra.mxu0 %v360
    %393 = vmatprep.subr.mxu0 0.0
    %394 = vmatpush1.msra.mxu0 0.0
    %395 = vmatprep.subr.mxu0 0.0
    %396 = vmatpush1.msra.mxu0 0.0
    %397 = vmatprep.subr.mxu0 0.0
    %398 = vmatpush1.msra.mxu0 0.0
    %399 = vmatprep.subr.mxu0 0.0
    %400 = vmatpush1.msra.mxu0 0.0
    %401 = vmatprep.subr.mxu0 0.0
    %402 = vmatpush1.msra.mxu0 0.0
    %403 = vmatprep.subr.mxu0 0.0
    %404 = vmatpush1.msra.mxu0 0.0
    %405 = vmatprep.subr.mxu0 0.0
    %406 = vmatpush1.msra.mxu0 0.0
    %407 = vmatprep.subr.mxu0 0.0
    %408 = vmatpush1.msra.mxu0 0.0
    %409 = vmatprep.subr.mxu0 0.0
    %410 = vmatpush1.msra.mxu0 0.0
    %411 = vmatprep.subr.mxu0 0.0
    %412 = vmatpush1.msra.mxu0 0.0
    %413 = vmatprep.subr.mxu0 0.0
    %414 = vmatpush1.msra.mxu0 0.0
    %415 = vmatprep.subr.mxu0 0.0
    %416 = vmatpush1.msra.mxu0 0.0
    %417 = vmatprep.subr.mxu0 0.0
    %418 = vmatpush1.msra.mxu0 0.0
    %419 = vmatprep.subr.mxu0 0.0
    %420 = vmatpush1.msra.mxu0 0.0
    %421 = vmatprep.subr.mxu0 0.0
    %422 = vmatpush1.msra.mxu0 0.0
    %423 = vmatprep.subr.mxu0 0.0
    %424 = vmatpush1.msra.mxu0 0.0
    %425 = vmatprep.mubr.f32.mxu0 0.0
    %426 = vmatmul.mubr.f32.gmra.mrb[0].mxu0 %v79
    %v427 = vpop.f32.mrb[0].mxu0
    %v428 = vadd.f32 0.0, %v427
    %v429 = vpop.f32.mrb[0].mxu0
    %430 = vdwg.mxu0
    %v431 = vmul.f32 %v428, %v305
    %v432 = vrot.slane %v431, 4
    %v433 = vmax.f32 %v431, %v432
    %v434 = vrot.slane %v433, 2
    %v435 = vmax.f32 %v433, %v434
    %v436 = vrot.slane %v435, 1
    %v437 = vmax.f32 %v435, %v436
    %v438 = vmax.f32 %v437, 1e-37
    %v439 = vrcp.pop %v438
    %v440 = vmul.f32 %v431, %v439
    %v441 = vlog2.pop %v438
    %v442 = vmul.f32 %v441, 0.6931472
    %v443 = vadd.f32 %v233, %v442
    %vm444 = vcmp.eq.s32.totalorder %v82, 2
    %v445 = vsel %vm444, 1, 0
    %v446 = vlaneseq
    %v447 = vshrl.u32 %v446, 7
    %v448 = vsub.s32 0, %v447
    %v449 = vrot.slane %v445, %v448
    %vm450 = vcmp.eq.s32.totalorder %v449, 1
    %v451 = vsel %vm450, %v440, %v231
    %v452 = vsel %vm444, %v443, %v233
    %453 = vmatprep.subr.mxu0 0.0
    %454 = vmatpush1.msra.mxu0 %v440
    %455 = vmatprep.subr.mxu0 0.0
    %456 = vmatpush1.msra.mxu0 0.0
    %457 = vmatprep.subr.mxu0 0.0
    %458 = vmatpush1.msra.mxu0 0.0
    %459 = vmatprep.subr.mxu0 0.0
    %460 = vmatpush1.msra.mxu0 0.0
    %461 = vmatprep.subr.mxu0 0.0
    %462 = vmatpush1.msra.mxu0 0.0
    %463 = vmatprep.subr.mxu0 0.0
    %464 = vmatpush1.msra.mxu0 0.0
    %465 = vmatprep.subr.mxu0 0.0
    %466 = vmatpush1.msra.mxu0 0.0
    %467 = vmatprep.subr.mxu0 0.0
    %468 = vmatpush1.msra.mxu0 0.0
    %469 = vmatprep.subr.mxu0 0.0
    %470 = vmatpush1.msra.mxu0 0.0
    %471 = vmatprep.subr.mxu0 0.0
    %472 = vmatpush1.msra.mxu0 0.0
    %473 = vmatprep.subr.mxu0 0.0
    %474 = vmatpush1.msra.mxu0 0.0
    %475 = vmatprep.subr.mxu0 0.0
    %476 = vmatpush1.msra.mxu0 0.0
    %477 = vmatprep.subr.mxu0 0.0
    %478 = vmatpush1.msra.mxu0 0.0
    %479 = vmatprep.subr.mxu0 0.0
    %480 = vmatpush1.msra.mxu0 0.0
    %481 = vmatprep.subr.mxu0 0.0
    %482 = vmatpush1.msra.mxu0 0.0
    %483 = vmatprep.subr.mxu0 0.0
    %484 = vmatpush1.msra.mxu0 0.0
    %485 = vmatprep.subr.mxu0 0.0
    %486 = vmatpush1.msra.mxu0 0.0
    %487 = vmatprep.subr.mxu0 0.0
    %488 = vmatpush1.msra.mxu0 0.0
    %489 = vmatprep.subr.mxu0 0.0
    %490 = vmatpush1.msra.mxu0 0.0
    %491 = vmatprep.subr.mxu0 0.0
    %492 = vmatpush1.msra.mxu0 0.0
    %493 = vmatprep.subr.mxu0 0.0
    %494 = vmatpush1.msra.mxu0 0.0
    %495 = vmatprep.subr.mxu0 0.0
    %496 = vmatpush1.msra.mxu0 0.0
    %497 = vmatprep.subr.mxu0 0.0
    %498 = vmatpush1.msra.mxu0 0.0
    %499 = vmatprep.subr.mxu0 0.0
    %500 = vmatpush1.msra.mxu0 0.0
    %501 = vmatprep.subr.mxu0 0.0
    %502 = vmatpush1.msra.mxu0 0.0
    %503 = vmatprep.subr.mxu0 0.0
    %504 = vmatpush1.msra.mxu0 0.0
    %505 = vmatprep.subr.mxu0 0.0
    %506 = vmatpush1.msra.mxu0 0.0
    %507 = vmatprep.subr.mxu0 0.0
    %508 = vmatpush1.msra.mxu0 0.0
    %509 = vmatprep.subr.mxu0 0.0
    %510 = vmatpush1.msra.mxu0 0.0
    %511 = vmatprep.subr.mxu0 0.0
    %512 = vmatpush1.msra.mxu0 0.0
    %513 = vmatprep.subr.mxu0 0.0
    %514 = vmatpush1.msra.mxu0 0.0
    %515 = vmatprep.subr.mxu0 0.0
    %516 = vmatpush1.msra.mxu0 0.0
    %517 = vmatprep.mubr.f32.mxu0 0.0
    %518 = vmatmul.mubr.f32.gmra.mrb[0].mxu0 %v236
    %v519 = vpop.f32.mrb[0].mxu0
    %v520 = vadd.f32 0.0, %v519
    %v521 = vpop.f32.mrb[0].mxu0
    %522 = vdwg.mxu0
    %v523 = vld [vmem:[#allocation2 + $0x2] sm:$0x1]
    %v524 = vlaneseq
    %v525 = vshrl.u32 %v524, 7
    %v526 = vsub.s32 0, %v525
    %v527 = vrot.slane %v523, %v526
    %vm528 = vcmp.eq.s32.totalorder %v84, %v527
    %vm529 = vcmp.eq.s32.totalorder %v85, %v527
    %vm530 = vcmp.eq.s32.totalorder %v86, %v527
    %vm531 = vcmp.eq.s32.totalorder %v87, %v527
    %vm532 = vcmp.eq.s32.totalorder %v88, %v527
    %vm533 = vcmp.eq.s32.totalorder %v89, %v527
    %vm534 = vcmp.eq.s32.totalorder %v90, %v527
    %vm535 = vcmp.eq.s32.totalorder %v91, %v527
    %vm536 = vcmp.eq.s32.totalorder %v92, %v527
    %vm537 = vcmp.eq.s32.totalorder %v93, %v527
    %vm538 = vcmp.eq.s32.totalorder %v94, %v527
    %vm539 = vcmp.eq.s32.totalorder %v95, %v527
    %vm540 = vcmp.eq.s32.totalorder %v96, %v527
    %vm541 = vcmp.eq.s32.totalorder %v97, %v527
    %vm542 = vcmp.eq.s32.totalorder %v98, %v527
    %vm543 = vcmp.eq.s32.totalorder %v99, %v527
    %v544 = vsel %vm528, 1, 0
    %v545 = vsel %vm529, 1, 0
    %v546 = vsel %vm530, 1, 0
    %v547 = vsel %vm531, 1, 0
    %v548 = vsel %vm532, 1, 0
    %v549 = vsel %vm533, 1, 0
    %v550 = vsel %vm534, 1, 0
    %v551 = vsel %vm535, 1, 0
    %v552 = vsel %vm536, 1, 0
    %v553 = vsel %vm537, 1, 0
    %v554 = vsel %vm538, 1, 0
    %v555 = vsel %vm539, 1, 0
    %v556 = vsel %vm540, 1, 0
    %v557 = vsel %vm541, 1, 0
    %v558 = vsel %vm542, 1, 0
    %v559 = vsel %vm543, 1, 0
    %v560 = vcvt.s32.f32 %v544
    %v561 = vcvt.s32.f32 %v545
    %v562 = vcvt.s32.f32 %v546
    %v563 = vcvt.s32.f32 %v547
    %v564 = vcvt.s32.f32 %v548
    %v565 = vcvt.s32.f32 %v549
    %v566 = vcvt.s32.f32 %v550
    %v567 = vcvt.s32.f32 %v551
    %v568 = vcvt.s32.f32 %v552
    %v569 = vcvt.s32.f32 %v553
    %v570 = vcvt.s32.f32 %v554
    %v571 = vcvt.s32.f32 %v555
    %v572 = vcvt.s32.f32 %v556
    %v573 = vcvt.s32.f32 %v557
    %v574 = vcvt.s32.f32 %v558
    %v575 = vcvt.s32.f32 %v559
    %576 = vmatprep.subr.mxu0 0.0
    %577 = vmatpush1.msra.mxu0 %v560
    %578 = vmatprep.subr.mxu0 0.0
    %579 = vmatpush1.msra.mxu0 %v561
    %580 = vmatprep.subr.mxu0 0.0
    %581 = vmatpush1.msra.mxu0 %v562
    %582 = vmatprep.subr.mxu0 0.0
    %583 = vmatpush1.msra.mxu0 %v563
    %584 = vmatprep.subr.mxu0 0.0
    %585 = vmatpush1.msra.mxu0 %v564
    %586 = vmatprep.subr.mxu0 0.0
    %587 = vmatpush1.msra.mxu0 %v565
    %588 = vmatprep.subr.mxu0 0.0
    %589 = vmatpush1.msra.mxu0 %v566
    %590 = vmatprep.subr.mxu0 0.0
    %591 = vmatpush1.msra.mxu0 %v567
    %592 = vmatprep.subr.mxu0 0.0
    %593 = vmatpush1.msra.mxu0 %v568
    %594 = vmatprep.subr.mxu0 0.0
    %595 = vmatpush1.msra.mxu0 %v569
    %596 = vmatprep.subr.mxu0 0.0
    %597 = vmatpush1.msra.mxu0 %v570
    %598 = vmatprep.subr.mxu0 0.0
    %599 = vmatpush1.msra.mxu0 %v571
    %600 = vmatprep.subr.mxu0 0.0
    %601 = vmatpush1.msra.mxu0 %v572
    %602 = vmatprep.subr.mxu0 0.0
    %603 = vmatpush1.msra.mxu0 %v573
    %604 = vmatprep.subr.mxu0 0.0
    %605 = vmatpush1.msra.mxu0 %v574
    %606 = vmatprep.subr.mxu0 0.0
    %607 = vmatpush1.msra.mxu0 %v575
    %608 = vmatprep.subr.mxu0 0.0
    %609 = vmatpush1.msra.mxu0 0.0
    %610 = vmatprep.subr.mxu0 0.0
    %611 = vmatpush1.msra.mxu0 0.0
    %612 = vmatprep.subr.mxu0 0.0
    %613 = vmatpush1.msra.mxu0 0.0
    %614 = vmatprep.subr.mxu0 0.0
    %615 = vmatpush1.msra.mxu0 0.0
    %616 = vmatprep.subr.mxu0 0.0
    %617 = vmatpush1.msra.mxu0 0.0
    %618 = vmatprep.subr.mxu0 0.0
    %619 = vmatpush1.msra.mxu0 0.0
    %620 = vmatprep.subr.mxu0 0.0
    %621 = vmatpush1.msra.mxu0 0.0
    %622 = vmatprep.subr.mxu0 0.0
    %623 = vmatpush1.msra.mxu0 0.0
    %624 = vmatprep.subr.mxu0 0.0
    %625 = vmatpush1.msra.mxu0 0.0
    %626 = vmatprep.subr.mxu0 0.0
    %627 = vmatpush1.msra.mxu0 0.0
    %628 = vmatprep.subr.mxu0 0.0
    %629 = vmatpush1.msra.mxu0 0.0
    %630 = vmatprep.subr.mxu0 0.0
    %631 = vmatpush1.msra.mxu0 0.0
    %632 = vmatprep.subr.mxu0 0.0
    %633 = vmatpush1.msra.mxu0 0.0
    %634 = vmatprep.subr.mxu0 0.0
    %635 = vmatpush1.msra.mxu0 0.0
    %636 = vmatprep.subr.mxu0 0.0
    %637 = vmatpush1.msra.mxu0 0.0
    %638 = vmatprep.subr.mxu0 0.0
    %639 = vmatpush1.msra.mxu0 0.0
    %640 = vmatprep.mubr.f32.mxu0 0.0
    %641 = vmatmul.mubr.f32.gmra.mrb[0].mxu0 %v79
    %v642 = vpop.f32.mrb[0].mxu0
    %v643 = vadd.f32 0.0, %v642
    %v644 = vpop.f32.mrb[0].mxu0
    %645 = vdwg.mxu0
    %v646 = vmul.f32 %v643, %v520
    %v647 = vrot.slane %v646, 4
    %v648 = vmax.f32 %v646, %v647
    %v649 = vrot.slane %v648, 2
    %v650 = vmax.f32 %v648, %v649
    %v651 = vrot.slane %v650, 1
    %v652 = vmax.f32 %v650, %v651
    %v653 = vmax.f32 %v652, 1e-37
    %v654 = vrcp.pop %v653
    %v655 = vmul.f32 %v646, %v654
    %v656 = vlog2.pop %v653
    %v657 = vmul.f32 %v656, 0.6931472
    %v658 = vadd.f32 %v443, %v657
    %vm659 = vcmp.eq.s32.totalorder %v82, 3
    %v660 = vsel %vm659, 1, 0
    %v661 = vlaneseq
    %v662 = vshrl.u32 %v661, 7
    %v663 = vsub.s32 0, %v662
    %v664 = vrot.slane %v660, %v663
    %vm665 = vcmp.eq.s32.totalorder %v664, 1
    %v666 = vsel %vm665, %v655, %v451
    %v667 = vsel %vm659, %v658, %v452
    %668 = vmatprep.subr.mxu0 0.0
    %669 = vmatpush1.msra.mxu0 %v655
    %670 = vmatprep.subr.mxu0 0.0
    %671 = vmatpush1.msra.mxu0 0.0
    %672 = vmatprep.subr.mxu0 0.0
    %673 = vmatpush1.msra.mxu0 0.0
    %674 = vmatprep.subr.mxu0 0.0
    %675 = vmatpush1.msra.mxu0 0.0
    %676 = vmatprep.subr.mxu0 0.0
    %677 = vmatpush1.msra.mxu0 0.0
    %678 = vmatprep.subr.mxu0 0.0
    %679 = vmatpush1.msra.mxu0 0.0
    %680 = vmatprep.subr.mxu0 0.0
    %681 = vmatpush1.msra.mxu0 0.0
    %682 = vmatprep.subr.mxu0 0.0
    %683 = vmatpush1.msra.mxu0 0.0
    %684 = vmatprep.subr.mxu0 0.0
    %685 = vmatpush1.msra.mxu0 0.0
    %686 = vmatprep.subr.mxu0 0.0
    %687 = vmatpush1.msra.mxu0 0.0
    %688 = vmatprep.subr.mxu0 0.0
    %689 = vmatpush1.msra.mxu0 0.0
    %690 = vmatprep.subr.mxu0 0.0
    %691 = vmatpush1.msra.mxu0 0.0
    %692 = vmatprep.subr.mxu0 0.0
    %693 = vmatpush1.msra.mxu0 0.0
    %694 = vmatprep.subr.mxu0 0.0
    %695 = vmatpush1.msra.mxu0 0.0
    %696 = vmatprep.subr.mxu0 0.0
    %697 = vmatpush1.msra.mxu0 0.0
    %698 = vmatprep.subr.mxu0 0.0
    %699 = vmatpush1.msra.mxu0 0.0
    %700 = vmatprep.subr.mxu0 0.0
    %701 = vmatpush1.msra.mxu0 0.0
    %702 = vmatprep.subr.mxu0 0.0
    %703 = vmatpush1.msra.mxu0 0.0
    %704 = vmatprep.subr.mxu0 0.0
    %705 = vmatpush1.msra.mxu0 0.0
    %706 = vmatprep.subr.mxu0 0.0
    %707 = vmatpush1.msra.mxu0 0.0
    %708 = vmatprep.subr.mxu0 0.0
    %709 = vmatpush1.msra.mxu0 0.0
    %710 = vmatprep.subr.mxu0 0.0
    %711 = vmatpush1.msra.mxu0 0.0
    %712 = vmatprep.subr.mxu0 0.0
    %713 = vmatpush1.msra.mxu0 0.0
    %714 = vmatprep.subr.mxu0 0.0
    %715 = vmatpush1.msra.mxu0 0.0
    %716 = vmatprep.subr.mxu0 0.0
    %717 = vmatpush1.msra.mxu0 0.0
    %718 = vmatprep.subr.mxu0 0.0
    %719 = vmatpush1.msra.mxu0 0.0
    %720 = vmatprep.subr.mxu0 0.0
    %721 = vmatpush1.msra.mxu0 0.0
    %722 = vmatprep.subr.mxu0 0.0
    %723 = vmatpush1.msra.mxu0 0.0
    %724 = vmatprep.subr.mxu0 0.0
    %725 = vmatpush1.msra.mxu0 0.0
    %726 = vmatprep.subr.mxu0 0.0
    %727 = vmatpush1.msra.mxu0 0.0
    %728 = vmatprep.subr.mxu0 0.0
    %729 = vmatpush1.msra.mxu0 0.0
    %730 = vmatprep.subr.mxu0 0.0
    %731 = vmatpush1.msra.mxu0 0.0
    %732 = vmatprep.mubr.f32.mxu0 0.0
    %733 = vmatmul.mubr.f32.gmra.mrb[0].mxu0 %v236
    %v734 = vpop.f32.mrb[0].mxu0
    %v735 = vadd.f32 0.0, %v734
    %v736 = vpop.f32.mrb[0].mxu0
    %737 = vdwg.mxu0
    %v738 = vld [vmem:[#allocation2 + $0x3] sm:$0x1]
    %v739 = vlaneseq
    %v740 = vshrl.u32 %v739, 7
    %v741 = vsub.s32 0, %v740
    %v742 = vrot.slane %v738, %v741
    %vm743 = vcmp.eq.s32.totalorder %v84, %v742
    %vm744 = vcmp.eq.s32.totalorder %v85, %v742
    %vm745 = vcmp.eq.s32.totalorder %v86, %v742
    %vm746 = vcmp.eq.s32.totalorder %v87, %v742
    %vm747 = vcmp.eq.s32.totalorder %v88, %v742
    %vm748 = vcmp.eq.s32.totalorder %v89, %v742
    %vm749 = vcmp.eq.s32.totalorder %v90, %v742
    %vm750 = vcmp.eq.s32.totalorder %v91, %v742
    %vm751 = vcmp.eq.s32.totalorder %v92, %v742
    %vm752 = vcmp.eq.s32.totalorder %v93, %v742
    %vm753 = vcmp.eq.s32.totalorder %v94, %v742
    %vm754 = vcmp.eq.s32.totalorder %v95, %v742
    %vm755 = vcmp.eq.s32.totalorder %v96, %v742
    %vm756 = vcmp.eq.s32.totalorder %v97, %v742
    %vm757 = vcmp.eq.s32.totalorder %v98, %v742
    %vm758 = vcmp.eq.s32.totalorder %v99, %v742
    %v759 = vsel %vm743, 1, 0
    %v760 = vsel %vm744, 1, 0
    %v761 = vsel %vm745, 1, 0
    %v762 = vsel %vm746, 1, 0
    %v763 = vsel %vm747, 1, 0
    %v764 = vsel %vm748, 1, 0
    %v765 = vsel %vm749, 1, 0
    %v766 = vsel %vm750, 1, 0
    %v767 = vsel %vm751, 1, 0
    %v768 = vsel %vm752, 1, 0
    %v769 = vsel %vm753, 1, 0
    %v770 = vsel %vm754, 1, 0
    %v771 = vsel %vm755, 1, 0
    %v772 = vsel %vm756, 1, 0
    %v773 = vsel %vm757, 1, 0
    %v774 = vsel %vm758, 1, 0
    %v775 = vcvt.s32.f32 %v759
    %v776 = vcvt.s32.f32 %v760
    %v777 = vcvt.s32.f32 %v761
    %v778 = vcvt.s32.f32 %v762
    %v779 = vcvt.s32.f32 %v763
    %v780 = vcvt.s32.f32 %v764
    %v781 = vcvt.s32.f32 %v765
    %v782 = vcvt.s32.f32 %v766
    %v783 = vcvt.s32.f32 %v767
    %v784 = vcvt.s32.f32 %v768
    %v785 = vcvt.s32.f32 %v769
    %v786 = vcvt.s32.f32 %v770
    %v787 = vcvt.s32.f32 %v771
    %v788 = vcvt.s32.f32 %v772
    %v789 = vcvt.s32.f32 %v773
    %v790 = vcvt.s32.f32 %v774
    %791 = vmatprep.subr.mxu0 0.0
    %792 = vmatpush1.msra.mxu0 %v775
    %793 = vmatprep.subr.mxu0 0.0
    %794 = vmatpush1.msra.mxu0 %v776
    %795 = vmatprep.subr.mxu0 0.0
    %796 = vmatpush1.msra.mxu0 %v777
    %797 = vmatprep.subr.mxu0 0.0
    %798 = vmatpush1.msra.mxu0 %v778
    %799 = vmatprep.subr.mxu0 0.0
    %800 = vmatpush1.msra.mxu0 %v779
    %801 = vmatprep.subr.mxu0 0.0
    %802 = vmatpush1.msra.mxu0 %v780
    %803 = vmatprep.subr.mxu0 0.0
    %804 = vmatpush1.msra.mxu0 %v781
    %805 = vmatprep.subr.mxu0 0.0
    %806 = vmatpush1.msra.mxu0 %v782
    %807 = vmatprep.subr.mxu0 0.0
    %808 = vmatpush1.msra.mxu0 %v783
    %809 = vmatprep.subr.mxu0 0.0
    %810 = vmatpush1.msra.mxu0 %v784
    %811 = vmatprep.subr.mxu0 0.0
    %812 = vmatpush1.msra.mxu0 %v785
    %813 = vmatprep.subr.mxu0 0.0
    %814 = vmatpush1.msra.mxu0 %v786
    %815 = vmatprep.subr.mxu0 0.0
    %816 = vmatpush1.msra.mxu0 %v787
    %817 = vmatprep.subr.mxu0 0.0
    %818 = vmatpush1.msra.mxu0 %v788
    %819 = vmatprep.subr.mxu0 0.0
    %820 = vmatpush1.msra.mxu0 %v789
    %821 = vmatprep.subr.mxu0 0.0
    %822 = vmatpush1.msra.mxu0 %v790
    %823 = vmatprep.subr.mxu0 0.0
    %824 = vmatpush1.msra.mxu0 0.0
    %825 = vmatprep.subr.mxu0 0.0
    %826 = vmatpush1.msra.mxu0 0.0
    %827 = vmatprep.subr.mxu0 0.0
    %828 = vmatpush1.msra.mxu0 0.0
    %829 = vmatprep.subr.mxu0 0.0
    %830 = vmatpush1.msra.mxu0 0.0
    %831 = vmatprep.subr.mxu0 0.0
    %832 = vmatpush1.msra.mxu0 0.0
    %833 = vmatprep.subr.mxu0 0.0
    %834 = vmatpush1.msra.mxu0 0.0
    %835 = vmatprep.subr.mxu0 0.0
    %836 = vmatpush1.msra.mxu0 0.0
    %837 = vmatprep.subr.mxu0 0.0
    %838 = vmatpush1.msra.mxu0 0.0
    %839 = vmatprep.subr.mxu0 0.0
    %840 = vmatpush1.msra.mxu0 0.0
    %841 = vmatprep.subr.mxu0 0.0
    %842 = vmatpush1.msra.mxu0 0.0
    %843 = vmatprep.subr.mxu0 0.0
    %844 = vmatpush1.msra.mxu0 0.0
    %845 = vmatprep.subr.mxu0 0.0
    %846 = vmatpush1.msra.mxu0 0.0
    %847 = vmatprep.subr.mxu0 0.0
    %848 = vmatpush1.msra.mxu0 0.0
    %849 = vmatprep.subr.mxu0 0.0
    %850 = vmatpush1.msra.mxu0 0.0
    %851 = vmatprep.subr.mxu0 0.0
    %852 = vmatpush1.msra.mxu0 0.0
    %853 = vmatprep.subr.mxu0 0.0
    %854 = vmatpush1.msra.mxu0 0.0
    %855 = vmatprep.mubr.f32.mxu0 0.0
    %856 = vmatmul.mubr.f32.gmra.mrb[0].mxu0 %v79
    %v857 = vpop.f32.mrb[0].mxu0
    %v858 = vadd.f32 0.0, %v857
    %v859 = vpop.f32.mrb[0].mxu0
    %860 = vdwg.mxu0
    %v861 = vmul.f32 %v858, %v735
    %v862 = vrot.slane %v861, 4
    %v863 = vmax.f32 %v861, %v862
    %v864 = vrot.slane %v863, 2
    %v865 = vmax.f32 %v863, %v864
    %v866 = vrot.slane %v865, 1
    %v867 = vmax.f32 %v865, %v866
    %v868 = vmax.f32 %v867, 1e-37
    %v869 = vrcp.pop %v868
    %v870 = vmul.f32 %v861, %v869
    %v871 = vlog2.pop %v868
    %v872 = vmul.f32 %v871, 0.6931472
    %v873 = vadd.f32 %v658, %v872
    %vm874 = vcmp.eq.s32.totalorder %v82, 4
    %v875 = vsel %vm874, 1, 0
    %v876 = vlaneseq
    %v877 = vshrl.u32 %v876, 7
    %v878 = vsub.s32 0, %v877
    %v879 = vrot.slane %v875, %v878
    %vm880 = vcmp.eq.s32.totalorder %v879, 1
    %v881 = vsel %vm880, %v870, %v666
    %v882 = vsel %vm874, %v873, %v667
    %883 = vmatprep.subr.mxu0 0.0
    %884 = vmatpush1.msra.mxu0 %v870
    %885 = vmatprep.subr.mxu0 0.0
    %886 = vmatpush1.msra.mxu0 0.0
    %887 = vmatprep.subr.mxu0 0.0
    %888 = vmatpush1.msra.mxu0 0.0
    %889 = vmatprep.subr.mxu0 0.0
    %890 = vmatpush1.msra.mxu0 0.0
    %891 = vmatprep.subr.mxu0 0.0
    %892 = vmatpush1.msra.mxu0 0.0
    %893 = vmatprep.subr.mxu0 0.0
    %894 = vmatpush1.msra.mxu0 0.0
    %895 = vmatprep.subr.mxu0 0.0
    %896 = vmatpush1.msra.mxu0 0.0
    %897 = vmatprep.subr.mxu0 0.0
    %898 = vmatpush1.msra.mxu0 0.0
    %899 = vmatprep.subr.mxu0 0.0
    %900 = vmatpush1.msra.mxu0 0.0
    %901 = vmatprep.subr.mxu0 0.0
    %902 = vmatpush1.msra.mxu0 0.0
    %903 = vmatprep.subr.mxu0 0.0
    %904 = vmatpush1.msra.mxu0 0.0
    %905 = vmatprep.subr.mxu0 0.0
    %906 = vmatpush1.msra.mxu0 0.0
    %907 = vmatprep.subr.mxu0 0.0
    %908 = vmatpush1.msra.mxu0 0.0
    %909 = vmatprep.subr.mxu0 0.0
    %910 = vmatpush1.msra.mxu0 0.0
    %911 = vmatprep.subr.mxu0 0.0
    %912 = vmatpush1.msra.mxu0 0.0
    %913 = vmatprep.subr.mxu0 0.0
    %914 = vmatpush1.msra.mxu0 0.0
    %915 = vmatprep.subr.mxu0 0.0
    %916 = vmatpush1.msra.mxu0 0.0
    %917 = vmatprep.subr.mxu0 0.0
    %918 = vmatpush1.msra.mxu0 0.0
    %919 = vmatprep.subr.mxu0 0.0
    %920 = vmatpush1.msra.mxu0 0.0
    %921 = vmatprep.subr.mxu0 0.0
    %922 = vmatpush1.msra.mxu0 0.0
    %923 = vmatprep.subr.mxu0 0.0
    %924 = vmatpush1.msra.mxu0 0.0
    %925 = vmatprep.subr.mxu0 0.0
    %926 = vmatpush1.msra.mxu0 0.0
    %927 = vmatprep.subr.mxu0 0.0
    %928 = vmatpush1.msra.mxu0 0.0
    %929 = vmatprep.subr.mxu0 0.0
    %930 = vmatpush1.msra.mxu0 0.0
    %931 = vmatprep.subr.mxu0 0.0
    %932 = vmatpush1.msra.mxu0 0.0
    %933 = vmatprep.subr.mxu0 0.0
    %934 = vmatpush1.msra.mxu0 0.0
    %935 = vmatprep.subr.mxu0 0.0
    %936 = vmatpush1.msra.mxu0 0.0
    %937 = vmatprep.subr.mxu0 0.0
    %938 = vmatpush1.msra.mxu0 0.0
    %939 = vmatprep.subr.mxu0 0.0
    %940 = vmatpush1.msra.mxu0 0.0
    %941 = vmatprep.subr.mxu0 0.0
    %942 = vmatpush1.msra.mxu0 0.0
    %943 = vmatprep.subr.mxu0 0.0
    %944 = vmatpush1.msra.mxu0 0.0
    %945 = vmatprep.subr.mxu0 0.0
    %946 = vmatpush1.msra.mxu0 0.0
    %947 = vmatprep.mubr.f32.mxu0 0.0
    %948 = vmatmul.mubr.f32.gmra.mrb[0].mxu0 %v236
    %v949 = vpop.f32.mrb[0].mxu0
    %v950 = vadd.f32 0.0, %v949
    %v951 = vpop.f32.mrb[0].mxu0
    %952 = vdwg.mxu0
    %v953 = vld [vmem:[#allocation2 + $0x4] sm:$0x1]
    %v954 = vlaneseq
    %v955 = vshrl.u32 %v954, 7
    %v956 = vsub.s32 0, %v955
    %v957 = vrot.slane %v953, %v956
    %vm958 = vcmp.eq.s32.totalorder %v84, %v957
    %vm959 = vcmp.eq.s32.totalorder %v85, %v957
    %vm960 = vcmp.eq.s32.totalorder %v86, %v957
    %vm961 = vcmp.eq.s32.totalorder %v87, %v957
    %vm962 = vcmp.eq.s32.totalorder %v88, %v957
    %vm963 = vcmp.eq.s32.totalorder %v89, %v957
    %vm964 = vcmp.eq.s32.totalorder %v90, %v957
    %vm965 = vcmp.eq.s32.totalorder %v91, %v957
    %vm966 = vcmp.eq.s32.totalorder %v92, %v957
    %vm967 = vcmp.eq.s32.totalorder %v93, %v957
    %vm968 = vcmp.eq.s32.totalorder %v94, %v957
    %vm969 = vcmp.eq.s32.totalorder %v95, %v957
    %vm970 = vcmp.eq.s32.totalorder %v96, %v957
    %vm971 = vcmp.eq.s32.totalorder %v97, %v957
    %vm972 = vcmp.eq.s32.totalorder %v98, %v957
    %vm973 = vcmp.eq.s32.totalorder %v99, %v957
    %v974 = vsel %vm958, 1, 0
    %v975 = vsel %vm959, 1, 0
    %v976 = vsel %vm960, 1, 0
    %v977 = vsel %vm961, 1, 0
    %v978 = vsel %vm962, 1, 0
    %v979 = vsel %vm963, 1, 0
    %v980 = vsel %vm964, 1, 0
    %v981 = vsel %vm965, 1, 0
    %v982 = vsel %vm966, 1, 0
    %v983 = vsel %vm967, 1, 0
    %v984 = vsel %vm968, 1, 0
    %v985 = vsel %vm969, 1, 0
    %v986 = vsel %vm970, 1, 0
    %v987 = vsel %vm971, 1, 0
    %v988 = vsel %vm972, 1, 0
    %v989 = vsel %vm973, 1, 0
    %v990 = vcvt.s32.f32 %v974
    %v991 = vcvt.s32.f32 %v975
    %v992 = vcvt.s32.f32 %v976
    %v993 = vcvt.s32.f32 %v977
    %v994 = vcvt.s32.f32 %v978
    %v995 = vcvt.s32.f32 %v979
    %v996 = vcvt.s32.f32 %v980
    %v997 = vcvt.s32.f32 %v981
    %v998 = vcvt.s32.f32 %v982
    %v999 = vcvt.s32.f32 %v983
    %v1000 = vcvt.s32.f32 %v984
    %v1001 = vcvt.s32.f32 %v985
    %v1002 = vcvt.s32.f32 %v986
    %v1003 = vcvt.s32.f32 %v987
    %v1004 = vcvt.s32.f32 %v988
    %v1005 = vcvt.s32.f32 %v989
    %1006 = vmatprep.subr.mxu0 0.0
    %1007 = vmatpush1.msra.mxu0 %v990
    %1008 = vmatprep.subr.mxu0 0.0
    %1009 = vmatpush1.msra.mxu0 %v991
    %1010 = vmatprep.subr.mxu0 0.0
    %1011 = vmatpush1.msra.mxu0 %v992
    %1012 = vmatprep.subr.mxu0 0.0
    %1013 = vmatpush1.msra.mxu0 %v993
    %1014 = vmatprep.subr.mxu0 0.0
    %1015 = vmatpush1.msra.mxu0 %v994
    %1016 = vmatprep.subr.mxu0 0.0
    %1017 = vmatpush1.msra.mxu0 %v995
    %1018 = vmatprep.subr.mxu0 0.0
    %1019 = vmatpush1.msra.mxu0 %v996
    %1020 = vmatprep.subr.mxu0 0.0
    %1021 = vmatpush1.msra.mxu0 %v997
    %1022 = vmatprep.subr.mxu0 0.0
    %1023 = vmatpush1.msra.mxu0 %v998
    %1024 = vmatprep.subr.mxu0 0.0
    %1025 = vmatpush1.msra.mxu0 %v999
    %1026 = vmatprep.subr.mxu0 0.0
    %1027 = vmatpush1.msra.mxu0 %v1000
    %1028 = vmatprep.subr.mxu0 0.0
    %1029 = vmatpush1.msra.mxu0 %v1001
    %1030 = vmatprep.subr.mxu0 0.0
    %1031 = vmatpush1.msra.mxu0 %v1002
    %1032 = vmatprep.subr.mxu0 0.0
    %1033 = vmatpush1.msra.mxu0 %v1003
    %1034 = vmatprep.subr.mxu0 0.0
    %1035 = vmatpush1.msra.mxu0 %v1004
    %1036 = vmatprep.subr.mxu0 0.0
    %1037 = vmatpush1.msra.mxu0 %v1005
    %1038 = vmatprep.subr.mxu0 0.0
    %1039 = vmatpush1.msra.mxu0 0.0
    %1040 = vmatprep.subr.mxu0 0.0
    %1041 = vmatpush1.msra.mxu0 0.0
    %1042 = vmatprep.subr.mxu0 0.0
    %1043 = vmatpush1.msra.mxu0 0.0
    %1044 = vmatprep.subr.mxu0 0.0
    %1045 = vmatpush1.msra.mxu0 0.0
    %1046 = vmatprep.subr.mxu0 0.0
    %1047 = vmatpush1.msra.mxu0 0.0
    %1048 = vmatprep.subr.mxu0 0.0
    %1049 = vmatpush1.msra.mxu0 0.0
    %1050 = vmatprep.subr.mxu0 0.0
    %1051 = vmatpush1.msra.mxu0 0.0
    %1052 = vmatprep.subr.mxu0 0.0
    %1053 = vmatpush1.msra.mxu0 0.0
    %1054 = vmatprep.subr.mxu0 0.0
    %1055 = vmatpush1.msra.mxu0 0.0
    %1056 = vmatprep.subr.mxu0 0.0
    %1057 = vmatpush1.msra.mxu0 0.0
    %1058 = vmatprep.subr.mxu0 0.0
    %1059 = vmatpush1.msra.mxu0 0.0
    %1060 = vmatprep.subr.mxu0 0.0
    %1061 = vmatpush1.msra.mxu0 0.0
    %1062 = vmatprep.subr.mxu0 0.0
    %1063 = vmatpush1.msra.mxu0 0.0
    %1064 = vmatprep.subr.mxu0 0.0
    %1065 = vmatpush1.msra.mxu0 0.0
    %1066 = vmatprep.subr.mxu0 0.0
    %1067 = vmatpush1.msra.mxu0 0.0
    %1068 = vmatprep.subr.mxu0 0.0
    %1069 = vmatpush1.msra.mxu0 0.0
    %1070 = vmatprep.mubr.f32.mxu0 0.0
    %1071 = vmatmul.mubr.f32.gmra.mrb[0].mxu0 %v79
    %v1072 = vpop.f32.mrb[0].mxu0
    %v1073 = vadd.f32 0.0, %v1072
    %v1074 = vpop.f32.mrb[0].mxu0
    %1075 = vdwg.mxu0
    %v1076 = vmul.f32 %v1073, %v950
    %v1077 = vrot.slane %v1076, 4
    %v1078 = vmax.f32 %v1076, %v1077
    %v1079 = vrot.slane %v1078, 2
    %v1080 = vmax.f32 %v1078, %v1079
    %v1081 = vrot.slane %v1080, 1
    %v1082 = vmax.f32 %v1080, %v1081
    %v1083 = vmax.f32 %v1082, 1e-37
    %v1084 = vrcp.pop %v1083
    %v1085 = vmul.f32 %v1076, %v1084
    %v1086 = vlog2.pop %v1083
    %v1087 = vmul.f32 %v1086, 0.6931472
    %v1088 = vadd.f32 %v873, %v1087
    %vm1089 = vcmp.eq.s32.totalorder %v82, 5
    %v1090 = vsel %vm1089, 1, 0
    %v1091 = vlaneseq
    %v1092 = vshrl.u32 %v1091, 7
    %v1093 = vsub.s32 0, %v1092
    %v1094 = vrot.slane %v1090, %v1093
    %vm1095 = vcmp.eq.s32.totalorder %v1094, 1
    %v1096 = vsel %vm1095, %v1085, %v881
    %v1097 = vsel %vm1089, %v1088, %v882
    %1098 = vmatprep.subr.mxu0 0.0
    %1099 = vmatpush1.msra.mxu0 %v1085
    %1100 = vmatprep.subr.mxu0 0.0
    %1101 = vmatpush1.msra.mxu0 0.0
    %1102 = vmatprep.subr.mxu0 0.0
    %1103 = vmatpush1.msra.mxu0 0.0
    %1104 = vmatprep.subr.mxu0 0.0
    %1105 = vmatpush1.msra.mxu0 0.0
    %1106 = vmatprep.subr.mxu0 0.0
    %1107 = vmatpush1.msra.mxu0 0.0
    %1108 = vmatprep.subr.mxu0 0.0
    %1109 = vmatpush1.msra.mxu0 0.0
    %1110 = vmatprep.subr.mxu0 0.0
    %1111 = vmatpush1.msra.mxu0 0.0
    %1112 = vmatprep.subr.mxu0 0.0
    %1113 = vmatpush1.msra.mxu0 0.0
    %1114 = vmatprep.subr.mxu0 0.0
    %1115 = vmatpush1.msra.mxu0 0.0
    %1116 = vmatprep.subr.mxu0 0.0
    %1117 = vmatpush1.msra.mxu0 0.0
    %1118 = vmatprep.subr.mxu0 0.0
    %1119 = vmatpush1.msra.mxu0 0.0
    %1120 = vmatprep.subr.mxu0 0.0
    %1121 = vmatpush1.msra.mxu0 0.0
    %1122 = vmatprep.subr.mxu0 0.0
    %1123 = vmatpush1.msra.mxu0 0.0
    %1124 = vmatprep.subr.mxu0 0.0
    %1125 = vmatpush1.msra.mxu0 0.0
    %1126 = vmatprep.subr.mxu0 0.0
    %1127 = vmatpush1.msra.mxu0 0.0
    %1128 = vmatprep.subr.mxu0 0.0
    %1129 = vmatpush1.msra.mxu0 0.0
    %1130 = vmatprep.subr.mxu0 0.0
    %1131 = vmatpush1.msra.mxu0 0.0
    %1132 = vmatprep.subr.mxu0 0.0
    %1133 = vmatpush1.msra.mxu0 0.0
    %1134 = vmatprep.subr.mxu0 0.0
    %1135 = vmatpush1.msra.mxu0 0.0
    %1136 = vmatprep.subr.mxu0 0.0
    %1137 = vmatpush1.msra.mxu0 0.0
    %1138 = vmatprep.subr.mxu0 0.0
    %1139 = vmatpush1.msra.mxu0 0.0
    %1140 = vmatprep.subr.mxu0 0.0
    %1141 = vmatpush1.msra.mxu0 0.0
    %1142 = vmatprep.subr.mxu0 0.0
    %1143 = vmatpush1.msra.mxu0 0.0
    %1144 = vmatprep.subr.mxu0 0.0
    %1145 = vmatpush1.msra.mxu0 0.0
    %1146 = vmatprep.subr.mxu0 0.0
    %1147 = vmatpush1.msra.mxu0 0.0
    %1148 = vmatprep.subr.mxu0 0.0
    %1149 = vmatpush1.msra.mxu0 0.0
    %1150 = vmatprep.subr.mxu0 0.0
    %1151 = vmatpush1.msra.mxu0 0.0
    %1152 = vmatprep.subr.mxu0 0.0
    %1153 = vmatpush1.msra.mxu0 0.0
    %1154 = vmatprep.subr.mxu0 0.0
    %1155 = vmatpush1.msra.mxu0 0.0
    %1156 = vmatprep.subr.mxu0 0.0
    %1157 = vmatpush1.msra.mxu0 0.0
    %1158 = vmatprep.subr.mxu0 0.0
    %1159 = vmatpush1.msra.mxu0 0.0
    %1160 = vmatprep.subr.mxu0 0.0
    %1161 = vmatpush1.msra.mxu0 0.0
    %1162 = vmatprep.mubr.f32.mxu0 0.0
    %1163 = vmatmul.mubr.f32.gmra.mrb[0].mxu0 %v236
    %v1164 = vpop.f32.mrb[0].mxu0
    %v1165 = vadd.f32 0.0, %v1164
    %v1166 = vpop.f32.mrb[0].mxu0
    %1167 = vdwg.mxu0
    %v1168 = vld [vmem:[#allocation2 + $0x5] sm:$0x1]
    %v1169 = vlaneseq
    %v1170 = vshrl.u32 %v1169, 7
    %v1171 = vsub.s32 0, %v1170
    %v1172 = vrot.slane %v1168, %v1171
    %vm1173 = vcmp.eq.s32.totalorder %v84, %v1172
    %vm1174 = vcmp.eq.s32.totalorder %v85, %v1172
    %vm1175 = vcmp.eq.s32.totalorder %v86, %v1172
    %vm1176 = vcmp.eq.s32.totalorder %v87, %v1172
    %vm1177 = vcmp.eq.s32.totalorder %v88, %v1172
    %vm1178 = vcmp.eq.s32.totalorder %v89, %v1172
    %vm1179 = vcmp.eq.s32.totalorder %v90, %v1172
    %vm1180 = vcmp.eq.s32.totalorder %v91, %v1172
    %vm1181 = vcmp.eq.s32.totalorder %v92, %v1172
    %vm1182 = vcmp.eq.s32.totalorder %v93, %v1172
    %vm1183 = vcmp.eq.s32.totalorder %v94, %v1172
    %vm1184 = vcmp.eq.s32.totalorder %v95, %v1172
    %vm1185 = vcmp.eq.s32.totalorder %v96, %v1172
    %vm1186 = vcmp.eq.s32.totalorder %v97, %v1172
    %vm1187 = vcmp.eq.s32.totalorder %v98, %v1172
    %vm1188 = vcmp.eq.s32.totalorder %v99, %v1172
    %v1189 = vsel %vm1173, 1, 0
    %v1190 = vsel %vm1174, 1, 0
    %v1191 = vsel %vm1175, 1, 0
    %v1192 = vsel %vm1176, 1, 0
    %v1193 = vsel %vm1177, 1, 0
    %v1194 = vsel %vm1178, 1, 0
    %v1195 = vsel %vm1179, 1, 0
    %v1196 = vsel %vm1180, 1, 0
    %v1197 = vsel %vm1181, 1, 0
    %v1198 = vsel %vm1182, 1, 0
    %v1199 = vsel %vm1183, 1, 0
    %v1200 = vsel %vm1184, 1, 0
    %v1201 = vsel %vm1185, 1, 0
    %v1202 = vsel %vm1186, 1, 0
    %v1203 = vsel %vm1187, 1, 0
    %v1204 = vsel %vm1188, 1, 0
    %v1205 = vcvt.s32.f32 %v1189
    %v1206 = vcvt.s32.f32 %v1190
    %v1207 = vcvt.s32.f32 %v1191
    %v1208 = vcvt.s32.f32 %v1192
    %v1209 = vcvt.s32.f32 %v1193
    %v1210 = vcvt.s32.f32 %v1194
    %v1211 = vcvt.s32.f32 %v1195
    %v1212 = vcvt.s32.f32 %v1196
    %v1213 = vcvt.s32.f32 %v1197
    %v1214 = vcvt.s32.f32 %v1198
    %v1215 = vcvt.s32.f32 %v1199
    %v1216 = vcvt.s32.f32 %v1200
    %v1217 = vcvt.s32.f32 %v1201
    %v1218 = vcvt.s32.f32 %v1202
    %v1219 = vcvt.s32.f32 %v1203
    %v1220 = vcvt.s32.f32 %v1204
    %1221 = vmatprep.subr.mxu0 0.0
    %1222 = vmatpush1.msra.mxu0 %v1205
    %1223 = vmatprep.subr.mxu0 0.0
    %1224 = vmatpush1.msra.mxu0 %v1206
    %1225 = vmatprep.subr.mxu0 0.0
    %1226 = vmatpush1.msra.mxu0 %v1207
    %1227 = vmatprep.subr.mxu0 0.0
    %1228 = vmatpush1.msra.mxu0 %v1208
    %1229 = vmatprep.subr.mxu0 0.0
    %1230 = vmatpush1.msra.mxu0 %v1209
    %1231 = vmatprep.subr.mxu0 0.0
    %1232 = vmatpush1.msra.mxu0 %v1210
    %1233 = vmatprep.subr.mxu0 0.0
    %1234 = vmatpush1.msra.mxu0 %v1211
    %1235 = vmatprep.subr.mxu0 0.0
    %1236 = vmatpush1.msra.mxu0 %v1212
    %1237 = vmatprep.subr.mxu0 0.0
    %1238 = vmatpush1.msra.mxu0 %v1213
    %1239 = vmatprep.subr.mxu0 0.0
    %1240 = vmatpush1.msra.mxu0 %v1214
    %1241 = vmatprep.subr.mxu0 0.0
    %1242 = vmatpush1.msra.mxu0 %v1215
    %1243 = vmatprep.subr.mxu0 0.0
    %1244 = vmatpush1.msra.mxu0 %v1216
    %1245 = vmatprep.subr.mxu0 0.0
    %1246 = vmatpush1.msra.mxu0 %v1217
    %1247 = vmatprep.subr.mxu0 0.0
    %1248 = vmatpush1.msra.mxu0 %v1218
    %1249 = vmatprep.subr.mxu0 0.0
    %1250 = vmatpush1.msra.mxu0 %v1219
    %1251 = vmatprep.subr.mxu0 0.0
    %1252 = vmatpush1.msra.mxu0 %v1220
    %1253 = vmatprep.subr.mxu0 0.0
    %1254 = vmatpush1.msra.mxu0 0.0
    %1255 = vmatprep.subr.mxu0 0.0
    %1256 = vmatpush1.msra.mxu0 0.0
    %1257 = vmatprep.subr.mxu0 0.0
    %1258 = vmatpush1.msra.mxu0 0.0
    %1259 = vmatprep.subr.mxu0 0.0
    %1260 = vmatpush1.msra.mxu0 0.0
    %1261 = vmatprep.subr.mxu0 0.0
    %1262 = vmatpush1.msra.mxu0 0.0
    %1263 = vmatprep.subr.mxu0 0.0
    %1264 = vmatpush1.msra.mxu0 0.0
    %1265 = vmatprep.subr.mxu0 0.0
    %1266 = vmatpush1.msra.mxu0 0.0
    %1267 = vmatprep.subr.mxu0 0.0
    %1268 = vmatpush1.msra.mxu0 0.0
    %1269 = vmatprep.subr.mxu0 0.0
    %1270 = vmatpush1.msra.mxu0 0.0
    %1271 = vmatprep.subr.mxu0 0.0
    %1272 = vmatpush1.msra.mxu0 0.0
    %1273 = vmatprep.subr.mxu0 0.0
    %1274 = vmatpush1.msra.mxu0 0.0
    %1275 = vmatprep.subr.mxu0 0.0
    %1276 = vmatpush1.msra.mxu0 0.0
    %1277 = vmatprep.subr.mxu0 0.0
    %1278 = vmatpush1.msra.mxu0 0.0
    %1279 = vmatprep.subr.mxu0 0.0
    %1280 = vmatpush1.msra.mxu0 0.0
    %1281 = vmatprep.subr.mxu0 0.0
    %1282 = vmatpush1.msra.mxu0 0.0
    %1283 = vmatprep.subr.mxu0 0.0
    %1284 = vmatpush1.msra.mxu0 0.0
    %1285 = vmatprep.mubr.f32.mxu0 0.0
    %1286 = vmatmul.mubr.f32.gmra.mrb[0].mxu0 %v79
    %v1287 = vpop.f32.mrb[0].mxu0
    %v1288 = vadd.f32 0.0, %v1287
    %v1289 = vpop.f32.mrb[0].mxu0
    %1290 = vdwg.mxu0
    %v1291 = vmul.f32 %v1288, %v1165
    %v1292 = vrot.slane %v1291, 4
    %v1293 = vmax.f32 %v1291, %v1292
    %v1294 = vrot.slane %v1293, 2
    %v1295 = vmax.f32 %v1293, %v1294
    %v1296 = vrot.slane %v1295, 1
    %v1297 = vmax.f32 %v1295, %v1296
    %v1298 = vmax.f32 %v1297, 1e-37
    %v1299 = vrcp.pop %v1298
    %v1300 = vmul.f32 %v1291, %v1299
    %v1301 = vlog2.pop %v1298
    %v1302 = vmul.f32 %v1301, 0.6931472
    %v1303 = vadd.f32 %v1088, %v1302
    %vm1304 = vcmp.eq.s32.totalorder %v82, 6
    %v1305 = vsel %vm1304, 1, 0
    %v1306 = vlaneseq
    %v1307 = vshrl.u32 %v1306, 7
    %v1308 = vsub.s32 0, %v1307
    %v1309 = vrot.slane %v1305, %v1308
    %vm1310 = vcmp.eq.s32.totalorder %v1309, 1
    %v1311 = vsel %vm1310, %v1300, %v1096
    %v1312 = vsel %vm1304, %v1303, %v1097
    %1313 = vmatprep.subr.mxu0 0.0
    %1314 = vmatpush1.msra.mxu0 %v1300
    %1315 = vmatprep.subr.mxu0 0.0
    %1316 = vmatpush1.msra.mxu0 0.0
    %1317 = vmatprep.subr.mxu0 0.0
    %1318 = vmatpush1.msra.mxu0 0.0
    %1319 = vmatprep.subr.mxu0 0.0
    %1320 = vmatpush1.msra.mxu0 0.0
    %1321 = vmatprep.subr.mxu0 0.0
    %1322 = vmatpush1.msra.mxu0 0.0
    %1323 = vmatprep.subr.mxu0 0.0
    %1324 = vmatpush1.msra.mxu0 0.0
    %1325 = vmatprep.subr.mxu0 0.0
    %1326 = vmatpush1.msra.mxu0 0.0
    %1327 = vmatprep.subr.mxu0 0.0
    %1328 = vmatpush1.msra.mxu0 0.0
    %1329 = vmatprep.subr.mxu0 0.0
    %1330 = vmatpush1.msra.mxu0 0.0
    %1331 = vmatprep.subr.mxu0 0.0
    %1332 = vmatpush1.msra.mxu0 0.0
    %1333 = vmatprep.subr.mxu0 0.0
    %1334 = vmatpush1.msra.mxu0 0.0
    %1335 = vmatprep.subr.mxu0 0.0
    %1336 = vmatpush1.msra.mxu0 0.0
    %1337 = vmatprep.subr.mxu0 0.0
    %1338 = vmatpush1.msra.mxu0 0.0
    %1339 = vmatprep.subr.mxu0 0.0
    %1340 = vmatpush1.msra.mxu0 0.0
    %1341 = vmatprep.subr.mxu0 0.0
    %1342 = vmatpush1.msra.mxu0 0.0
    %1343 = vmatprep.subr.mxu0 0.0
    %1344 = vmatpush1.msra.mxu0 0.0
    %1345 = vmatprep.subr.mxu0 0.0
    %1346 = vmatpush1.msra.mxu0 0.0
    %1347 = vmatprep.subr.mxu0 0.0
    %1348 = vmatpush1.msra.mxu0 0.0
    %1349 = vmatprep.subr.mxu0 0.0
    %1350 = vmatpush1.msra.mxu0 0.0
    %1351 = vmatprep.subr.mxu0 0.0
    %1352 = vmatpush1.msra.mxu0 0.0
    %1353 = vmatprep.subr.mxu0 0.0
    %1354 = vmatpush1.msra.mxu0 0.0
    %1355 = vmatprep.subr.mxu0 0.0
    %1356 = vmatpush1.msra.mxu0 0.0
    %1357 = vmatprep.subr.mxu0 0.0
    %1358 = vmatpush1.msra.mxu0 0.0
    %1359 = vmatprep.subr.mxu0 0.0
    %1360 = vmatpush1.msra.mxu0 0.0
    %1361 = vmatprep.subr.mxu0 0.0
    %1362 = vmatpush1.msra.mxu0 0.0
    %1363 = vmatprep.subr.mxu0 0.0
    %1364 = vmatpush1.msra.mxu0 0.0
    %1365 = vmatprep.subr.mxu0 0.0
    %1366 = vmatpush1.msra.mxu0 0.0
    %1367 = vmatprep.subr.mxu0 0.0
    %1368 = vmatpush1.msra.mxu0 0.0
    %1369 = vmatprep.subr.mxu0 0.0
    %1370 = vmatpush1.msra.mxu0 0.0
    %1371 = vmatprep.subr.mxu0 0.0
    %1372 = vmatpush1.msra.mxu0 0.0
    %1373 = vmatprep.subr.mxu0 0.0
    %1374 = vmatpush1.msra.mxu0 0.0
    %1375 = vmatprep.subr.mxu0 0.0
    %1376 = vmatpush1.msra.mxu0 0.0
    %1377 = vmatprep.mubr.f32.mxu0 0.0
    %1378 = vmatmul.mubr.f32.gmra.mrb[0].mxu0 %v236
    %v1379 = vpop.f32.mrb[0].mxu0
    %v1380 = vadd.f32 0.0, %v1379
    %v1381 = vpop.f32.mrb[0].mxu0
    %1382 = vdwg.mxu0
    %v1383 = vld [vmem:[#allocation2 + $0x6] sm:$0x1]
    %v1384 = vlaneseq
    %v1385 = vshrl.u32 %v1384, 7
    %v1386 = vsub.s32 0, %v1385
    %v1387 = vrot.slane %v1383, %v1386
    %vm1388 = vcmp.eq.s32.totalorder %v84, %v1387
    %vm1389 = vcmp.eq.s32.totalorder %v85, %v1387
    %vm1390 = vcmp.eq.s32.totalorder %v86, %v1387
    %vm1391 = vcmp.eq.s32.totalorder %v87, %v1387
    %vm1392 = vcmp.eq.s32.totalorder %v88, %v1387
    %vm1393 = vcmp.eq.s32.totalorder %v89, %v1387
    %vm1394 = vcmp.eq.s32.totalorder %v90, %v1387
    %vm1395 = vcmp.eq.s32.totalorder %v91, %v1387
    %vm1396 = vcmp.eq.s32.totalorder %v92, %v1387
    %vm1397 = vcmp.eq.s32.totalorder %v93, %v1387
    %vm1398 = vcmp.eq.s32.totalorder %v94, %v1387
    %vm1399 = vcmp.eq.s32.totalorder %v95, %v1387
    %vm1400 = vcmp.eq.s32.totalorder %v96, %v1387
    %vm1401 = vcmp.eq.s32.totalorder %v97, %v1387
    %vm1402 = vcmp.eq.s32.totalorder %v98, %v1387
    %vm1403 = vcmp.eq.s32.totalorder %v99, %v1387
    %v1404 = vsel %vm1388, 1, 0
    %v1405 = vsel %vm1389, 1, 0
    %v1406 = vsel %vm1390, 1, 0
    %v1407 = vsel %vm1391, 1, 0
    %v1408 = vsel %vm1392, 1, 0
    %v1409 = vsel %vm1393, 1, 0
    %v1410 = vsel %vm1394, 1, 0
    %v1411 = vsel %vm1395, 1, 0
    %v1412 = vsel %vm1396, 1, 0
    %v1413 = vsel %vm1397, 1, 0
    %v1414 = vsel %vm1398, 1, 0
    %v1415 = vsel %vm1399, 1, 0
    %v1416 = vsel %vm1400, 1, 0
    %v1417 = vsel %vm1401, 1, 0
    %v1418 = vsel %vm1402, 1, 0
    %v1419 = vsel %vm1403, 1, 0
    %v1420 = vcvt.s32.f32 %v1404
    %v1421 = vcvt.s32.f32 %v1405
    %v1422 = vcvt.s32.f32 %v1406
    %v1423 = vcvt.s32.f32 %v1407
    %v1424 = vcvt.s32.f32 %v1408
    %v1425 = vcvt.s32.f32 %v1409
    %v1426 = vcvt.s32.f32 %v1410
    %v1427 = vcvt.s32.f32 %v1411
    %v1428 = vcvt.s32.f32 %v1412
    %v1429 = vcvt.s32.f32 %v1413
    %v1430 = vcvt.s32.f32 %v1414
    %v1431 = vcvt.s32.f32 %v1415
    %v1432 = vcvt.s32.f32 %v1416
    %v1433 = vcvt.s32.f32 %v1417
    %v1434 = vcvt.s32.f32 %v1418
    %v1435 = vcvt.s32.f32 %v1419
    %1436 = vmatprep.subr.mxu0 0.0
    %1437 = vmatpush1.msra.mxu0 %v1420
    %1438 = vmatprep.subr.mxu0 0.0
    %1439 = vmatpush1.msra.mxu0 %v1421
    %1440 = vmatprep.subr.mxu0 0.0
    %1441 = vmatpush1.msra.mxu0 %v1422
    %1442 = vmatprep.subr.mxu0 0.0
    %1443 = vmatpush1.msra.mxu0 %v1423
    %1444 = vmatprep.subr.mxu0 0.0
    %1445 = vmatpush1.msra.mxu0 %v1424
    %1446 = vmatprep.subr.mxu0 0.0
    %1447 = vmatpush1.msra.mxu0 %v1425
    %1448 = vmatprep.subr.mxu0 0.0
    %1449 = vmatpush1.msra.mxu0 %v1426
    %1450 = vmatprep.subr.mxu0 0.0
    %1451 = vmatpush1.msra.mxu0 %v1427
    %1452 = vmatprep.subr.mxu0 0.0
    %1453 = vmatpush1.msra.mxu0 %v1428
    %1454 = vmatprep.subr.mxu0 0.0
    %1455 = vmatpush1.msra.mxu0 %v1429
    %1456 = vmatprep.subr.mxu0 0.0
    %1457 = vmatpush1.msra.mxu0 %v1430
    %1458 = vmatprep.subr.mxu0 0.0
    %1459 = vmatpush1.msra.mxu0 %v1431
    %1460 = vmatprep.subr.mxu0 0.0
    %1461 = vmatpush1.msra.mxu0 %v1432
    %1462 = vmatprep.subr.mxu0 0.0
    %1463 = vmatpush1.msra.mxu0 %v1433
    %1464 = vmatprep.subr.mxu0 0.0
    %1465 = vmatpush1.msra.mxu0 %v1434
    %1466 = vmatprep.subr.mxu0 0.0
    %1467 = vmatpush1.msra.mxu0 %v1435
    %1468 = vmatprep.subr.mxu0 0.0
    %1469 = vmatpush1.msra.mxu0 0.0
    %1470 = vmatprep.subr.mxu0 0.0
    %1471 = vmatpush1.msra.mxu0 0.0
    %1472 = vmatprep.subr.mxu0 0.0
    %1473 = vmatpush1.msra.mxu0 0.0
    %1474 = vmatprep.subr.mxu0 0.0
    %1475 = vmatpush1.msra.mxu0 0.0
    %1476 = vmatprep.subr.mxu0 0.0
    %1477 = vmatpush1.msra.mxu0 0.0
    %1478 = vmatprep.subr.mxu0 0.0
    %1479 = vmatpush1.msra.mxu0 0.0
    %1480 = vmatprep.subr.mxu0 0.0
    %1481 = vmatpush1.msra.mxu0 0.0
    %1482 = vmatprep.subr.mxu0 0.0
    %1483 = vmatpush1.msra.mxu0 0.0
    %1484 = vmatprep.subr.mxu0 0.0
    %1485 = vmatpush1.msra.mxu0 0.0
    %1486 = vmatprep.subr.mxu0 0.0
    %1487 = vmatpush1.msra.mxu0 0.0
    %1488 = vmatprep.subr.mxu0 0.0
    %1489 = vmatpush1.msra.mxu0 0.0
    %1490 = vmatprep.subr.mxu0 0.0
    %1491 = vmatpush1.msra.mxu0 0.0
    %1492 = vmatprep.subr.mxu0 0.0
    %1493 = vmatpush1.msra.mxu0 0.0
    %1494 = vmatprep.subr.mxu0 0.0
    %1495 = vmatpush1.msra.mxu0 0.0
    %1496 = vmatprep.subr.mxu0 0.0
    %1497 = vmatpush1.msra.mxu0 0.0
    %1498 = vmatprep.subr.mxu0 0.0
    %1499 = vmatpush1.msra.mxu0 0.0
    %1500 = vmatprep.mubr.f32.mxu0 0.0
    %1501 = vmatmul.mubr.f32.gmra.mrb[0].mxu0 %v79
    %v1502 = vpop.f32.mrb[0].mxu0
    %v1503 = vadd.f32 0.0, %v1502
    %v1504 = vpop.f32.mrb[0].mxu0
    %1505 = vdwg.mxu0
    %v1506 = vmul.f32 %v1503, %v1380
    %v1507 = vrot.slane %v1506, 4
    %v1508 = vmax.f32 %v1506, %v1507
    %v1509 = vrot.slane %v1508, 2
    %v1510 = vmax.f32 %v1508, %v1509
    %v1511 = vrot.slane %v1510, 1
    %v1512 = vmax.f32 %v1510, %v1511
    %v1513 = vmax.f32 %v1512, 1e-37
    %v1514 = vrcp.pop %v1513
    %v1515 = vmul.f32 %v1506, %v1514
    %v1516 = vlog2.pop %v1513
    %v1517 = vmul.f32 %v1516, 0.6931472
    %v1518 = vadd.f32 %v1303, %v1517
    %vm1519 = vcmp.eq.s32.totalorder %v82, 7
    %v1520 = vsel %vm1519, 1, 0
    %v1521 = vlaneseq
    %v1522 = vshrl.u32 %v1521, 7
    %v1523 = vsub.s32 0, %v1522
    %v1524 = vrot.slane %v1520, %v1523
    %vm1525 = vcmp.eq.s32.totalorder %v1524, 1
    %v1526 = vsel %vm1525, %v1515, %v1311
    %v1527 = vsel %vm1519, %v1518, %v1312
    %1528 = vmatprep.subr.mxu0 0.0
    %1529 = vmatpush1.msra.mxu0 %v1515
    %1530 = vmatprep.subr.mxu0 0.0
    %1531 = vmatpush1.msra.mxu0 0.0
    %1532 = vmatprep.subr.mxu0 0.0
    %1533 = vmatpush1.msra.mxu0 0.0
    %1534 = vmatprep.subr.mxu0 0.0
    %1535 = vmatpush1.msra.mxu0 0.0
    %1536 = vmatprep.subr.mxu0 0.0
    %1537 = vmatpush1.msra.mxu0 0.0
    %1538 = vmatprep.subr.mxu0 0.0
    %1539 = vmatpush1.msra.mxu0 0.0
    %1540 = vmatprep.subr.mxu0 0.0
    %1541 = vmatpush1.msra.mxu0 0.0
    %1542 = vmatprep.subr.mxu0 0.0
    %1543 = vmatpush1.msra.mxu0 0.0
    %1544 = vmatprep.subr.mxu0 0.0
    %1545 = vmatpush1.msra.mxu0 0.0
    %1546 = vmatprep.subr.mxu0 0.0
    %1547 = vmatpush1.msra.mxu0 0.0
    %1548 = vmatprep.subr.mxu0 0.0
    %1549 = vmatpush1.msra.mxu0 0.0
    %1550 = vmatprep.subr.mxu0 0.0
    %1551 = vmatpush1.msra.mxu0 0.0
    %1552 = vmatprep.subr.mxu0 0.0
    %1553 = vmatpush1.msra.mxu0 0.0
    %1554 = vmatprep.subr.mxu0 0.0
    %1555 = vmatpush1.msra.mxu0 0.0
    %1556 = vmatprep.subr.mxu0 0.0
    %1557 = vmatpush1.msra.mxu0 0.0
    %1558 = vmatprep.subr.mxu0 0.0
    %1559 = vmatpush1.msra.mxu0 0.0
    %1560 = vmatprep.subr.mxu0 0.0
    %1561 = vmatpush1.msra.mxu0 0.0
    %1562 = vmatprep.subr.mxu0 0.0
    %1563 = vmatpush1.msra.mxu0 0.0
    %1564 = vmatprep.subr.mxu0 0.0
    %1565 = vmatpush1.msra.mxu0 0.0
    %1566 = vmatprep.subr.mxu0 0.0
    %1567 = vmatpush1.msra.mxu0 0.0
    %1568 = vmatprep.subr.mxu0 0.0
    %1569 = vmatpush1.msra.mxu0 0.0
    %1570 = vmatprep.subr.mxu0 0.0
    %1571 = vmatpush1.msra.mxu0 0.0
    %1572 = vmatprep.subr.mxu0 0.0
    %1573 = vmatpush1.msra.mxu0 0.0
    %1574 = vmatprep.subr.mxu0 0.0
    %1575 = vmatpush1.msra.mxu0 0.0
    %1576 = vmatprep.subr.mxu0 0.0
    %1577 = vmatpush1.msra.mxu0 0.0
    %1578 = vmatprep.subr.mxu0 0.0
    %1579 = vmatpush1.msra.mxu0 0.0
    %1580 = vmatprep.subr.mxu0 0.0
    %1581 = vmatpush1.msra.mxu0 0.0
    %1582 = vmatprep.subr.mxu0 0.0
    %1583 = vmatpush1.msra.mxu0 0.0
    %1584 = vmatprep.subr.mxu0 0.0
    %1585 = vmatpush1.msra.mxu0 0.0
    %1586 = vmatprep.subr.mxu0 0.0
    %1587 = vmatpush1.msra.mxu0 0.0
    %1588 = vmatprep.subr.mxu0 0.0
    %1589 = vmatpush1.msra.mxu0 0.0
    %1590 = vmatprep.subr.mxu0 0.0
    %1591 = vmatpush1.msra.mxu0 0.0
    %1592 = vmatprep.mubr.f32.mxu0 0.0
    %1593 = vmatmul.mubr.f32.gmra.mrb[0].mxu0 %v236
    %v1594 = vpop.f32.mrb[0].mxu0
    %v1595 = vadd.f32 0.0, %v1594
    %v1596 = vpop.f32.mrb[0].mxu0
    %1597 = vdwg.mxu0
    %v1598 = vld [vmem:[#allocation2 + $0x7] sm:$0x1]
    %v1599 = vlaneseq
    %v1600 = vshrl.u32 %v1599, 7
    %v1601 = vsub.s32 0, %v1600
    %v1602 = vrot.slane %v1598, %v1601
    %vm1603 = vcmp.eq.s32.totalorder %v84, %v1602
    %vm1604 = vcmp.eq.s32.totalorder %v85, %v1602
    %vm1605 = vcmp.eq.s32.totalorder %v86, %v1602
    %vm1606 = vcmp.eq.s32.totalorder %v87, %v1602
    %vm1607 = vcmp.eq.s32.totalorder %v88, %v1602
    %vm1608 = vcmp.eq.s32.totalorder %v89, %v1602
    %vm1609 = vcmp.eq.s32.totalorder %v90, %v1602
    %vm1610 = vcmp.eq.s32.totalorder %v91, %v1602
    %vm1611 = vcmp.eq.s32.totalorder %v92, %v1602
    %vm1612 = vcmp.eq.s32.totalorder %v93, %v1602
    %vm1613 = vcmp.eq.s32.totalorder %v94, %v1602
    %vm1614 = vcmp.eq.s32.totalorder %v95, %v1602
    %vm1615 = vcmp.eq.s32.totalorder %v96, %v1602
    %vm1616 = vcmp.eq.s32.totalorder %v97, %v1602
    %vm1617 = vcmp.eq.s32.totalorder %v98, %v1602
    %vm1618 = vcmp.eq.s32.totalorder %v99, %v1602
    %v1619 = vsel %vm1603, 1, 0
    %v1620 = vsel %vm1604, 1, 0
    %v1621 = vsel %vm1605, 1, 0
    %v1622 = vsel %vm1606, 1, 0
    %v1623 = vsel %vm1607, 1, 0
    %v1624 = vsel %vm1608, 1, 0
    %v1625 = vsel %vm1609, 1, 0
    %v1626 = vsel %vm1610, 1, 0
    %v1627 = vsel %vm1611, 1, 0
    %v1628 = vsel %vm1612, 1, 0
    %v1629 = vsel %vm1613, 1, 0
    %v1630 = vsel %vm1614, 1, 0
    %v1631 = vsel %vm1615, 1, 0
    %v1632 = vsel %vm1616, 1, 0
    %v1633 = vsel %vm1617, 1, 0
    %v1634 = vsel %vm1618, 1, 0
    %v1635 = vcvt.s32.f32 %v1619
    %v1636 = vcvt.s32.f32 %v1620
    %v1637 = vcvt.s32.f32 %v1621
    %v1638 = vcvt.s32.f32 %v1622
    %v1639 = vcvt.s32.f32 %v1623
    %v1640 = vcvt.s32.f32 %v1624
    %v1641 = vcvt.s32.f32 %v1625
    %v1642 = vcvt.s32.f32 %v1626
    %v1643 = vcvt.s32.f32 %v1627
    %v1644 = vcvt.s32.f32 %v1628
    %v1645 = vcvt.s32.f32 %v1629
    %v1646 = vcvt.s32.f32 %v1630
    %v1647 = vcvt.s32.f32 %v1631
    %v1648 = vcvt.s32.f32 %v1632
    %v1649 = vcvt.s32.f32 %v1633
    %v1650 = vcvt.s32.f32 %v1634
    %1651 = vmatprep.subr.mxu0 0.0
    %1652 = vmatpush1.msra.mxu0 %v1635
    %1653 = vmatprep.subr.mxu0 0.0
    %1654 = vmatpush1.msra.mxu0 %v1636
    %1655 = vmatprep.subr.mxu0 0.0
    %1656 = vmatpush1.msra.mxu0 %v1637
    %1657 = vmatprep.subr.mxu0 0.0
    %1658 = vmatpush1.msra.mxu0 %v1638
    %1659 = vmatprep.subr.mxu0 0.0
    %1660 = vmatpush1.msra.mxu0 %v1639
    %1661 = vmatprep.subr.mxu0 0.0
    %1662 = vmatpush1.msra.mxu0 %v1640
    %1663 = vmatprep.subr.mxu0 0.0
    %1664 = vmatpush1.msra.mxu0 %v1641
    %1665 = vmatprep.subr.mxu0 0.0
    %1666 = vmatpush1.msra.mxu0 %v1642
    %1667 = vmatprep.subr.mxu0 0.0
    %1668 = vmatpush1.msra.mxu0 %v1643
    %1669 = vmatprep.subr.mxu0 0.0
    %1670 = vmatpush1.msra.mxu0 %v1644
    %1671 = vmatprep.subr.mxu0 0.0
    %1672 = vmatpush1.msra.mxu0 %v1645
    %1673 = vmatprep.subr.mxu0 0.0
    %1674 = vmatpush1.msra.mxu0 %v1646
    %1675 = vmatprep.subr.mxu0 0.0
    %1676 = vmatpush1.msra.mxu0 %v1647
    %1677 = vmatprep.subr.mxu0 0.0
    %1678 = vmatpush1.msra.mxu0 %v1648
    %1679 = vmatprep.subr.mxu0 0.0
    %1680 = vmatpush1.msra.mxu0 %v1649
    %1681 = vmatprep.subr.mxu0 0.0
    %1682 = vmatpush1.msra.mxu0 %v1650
    %1683 = vmatprep.subr.mxu0 0.0
    %1684 = vmatpush1.msra.mxu0 0.0
    %1685 = vmatprep.subr.mxu0 0.0
    %1686 = vmatpush1.msra.mxu0 0.0
    %1687 = vmatprep.subr.mxu0 0.0
    %1688 = vmatpush1.msra.mxu0 0.0
    %1689 = vmatprep.subr.mxu0 0.0
    %1690 = vmatpush1.msra.mxu0 0.0
    %1691 = vmatprep.subr.mxu0 0.0
    %1692 = vmatpush1.msra.mxu0 0.0
    %1693 = vmatprep.subr.mxu0 0.0
    %1694 = vmatpush1.msra.mxu0 0.0
    %1695 = vmatprep.subr.mxu0 0.0
    %1696 = vmatpush1.msra.mxu0 0.0
    %1697 = vmatprep.subr.mxu0 0.0
    %1698 = vmatpush1.msra.mxu0 0.0
    %1699 = vmatprep.subr.mxu0 0.0
    %1700 = vmatpush1.msra.mxu0 0.0
    %1701 = vmatprep.subr.mxu0 0.0
    %1702 = vmatpush1.msra.mxu0 0.0
    %1703 = vmatprep.subr.mxu0 0.0
    %1704 = vmatpush1.msra.mxu0 0.0
    %1705 = vmatprep.subr.mxu0 0.0
    %1706 = vmatpush1.msra.mxu0 0.0
    %1707 = vmatprep.subr.mxu0 0.0
    %1708 = vmatpush1.msra.mxu0 0.0
    %1709 = vmatprep.subr.mxu0 0.0
    %1710 = vmatpush1.msra.mxu0 0.0
    %1711 = vmatprep.subr.mxu0 0.0
    %1712 = vmatpush1.msra.mxu0 0.0
    %1713 = vmatprep.subr.mxu0 0.0
    %1714 = vmatpush1.msra.mxu0 0.0
    %1715 = vmatprep.mubr.f32.mxu0 0.0
    %1716 = vmatmul.mubr.f32.gmra.mrb[0].mxu0 %v79
    %v1717 = vpop.f32.mrb[0].mxu0
    %v1718 = vadd.f32 0.0, %v1717
    %v1719 = vpop.f32.mrb[0].mxu0
    %1720 = vdwg.mxu0
    %v1721 = vmul.f32 %v1718, %v1595
    %v1722 = vrot.slane %v1721, 4
    %v1723 = vmax.f32 %v1721, %v1722
    %v1724 = vrot.slane %v1723, 2
    %v1725 = vmax.f32 %v1723, %v1724
    %v1726 = vrot.slane %v1725, 1
    %v1727 = vmax.f32 %v1725, %v1726
    %v1728 = vmax.f32 %v1727, 1e-37
    %v1729 = vrcp.pop %v1728
    %v1730 = vmul.f32 %v1721, %v1729
    %v1731 = vlog2.pop %v1728
    %v1732 = vmul.f32 %v1731, 0.6931472
    %v1733 = vadd.f32 %v1518, %v1732
    %vm1734 = vcmp.eq.s32.totalorder %v82, 8
    %v1735 = vsel %vm1734, 1, 0
    %v1736 = vlaneseq
    %v1737 = vshrl.u32 %v1736, 7
    %v1738 = vsub.s32 0, %v1737
    %v1739 = vrot.slane %v1735, %v1738
    %vm1740 = vcmp.eq.s32.totalorder %v1739, 1
    %v1741 = vsel %vm1740, %v1730, %v1526
    %v1742 = vsel %vm1734, %v1733, %v1527
    %v1743 = vrot.slane %v1741, 4
    %v1744 = vadd.f32 %v1741, %v1743
    %v1745 = vrot.slane %v1744, 2
    %v1746 = vadd.f32 %v1744, %v1745
    %v1747 = vrot.slane %v1746, 1
    %v1748 = vadd.f32 %v1746, %v1747
    %v1749 = vlog2.pop %v1748
    %v1750 = vmul.f32 %v1749, 0.6931472
    %v1751 = vadd.f32 %v1742, %v1750
    %1752 = vst [vmem:[#allocation11] sm:$0x1] %v1751
    // Predicated region
    $region42: #{tpu_custom_call.1} parent=1 // pred_check
      _
    $region43: #{tpu_custom_call.1} parent=1 // pred_check_branch
      %1754 = sbr.rel (0) target = $region45
    $region44: #{tpu_custom_call.1} parent=1 // pred_region
      %s1756 = ssub.s32 16, 16
      %1757 = vsyncadd [#allocation4], %s1756
      %s1759 = sshll.u32 [#allocation11], 4
      %s1760 = int_to_ptr.vmem [resolvable:$true] %s1759
      %1762 = dma.vmem_to_hbm [thread:$0]  %s1760, 16, %s5, [#allocation4]
    $region45: #{tpu_custom_call.1} parent=1 // pred_fallthru
      _
    // Predicated region
    $region46: #{tpu_custom_call.1} parent=1 // pred_check
      _
    $region47: #{tpu_custom_call.1} parent=1 // pred_check_branch
      %1764 = sbr.rel (0) target = $region49
    $region48: #{tpu_custom_call.1} parent=1 // pred_region
      %1765 = dma.done [#allocation4], 16
    $region49: #{tpu_custom_call.1} parent=1 // pred_fallthru
      _
    %1766 = vsyncpa [#allocation3], 1
    %1767 = vsyncpa [#allocation6], 1
    %1768 = vsyncpa [#allocation9], 1
    %1769 = vsyncpa [#allocation4], 1

</llo_original>
